<compile_context>
chip_gen: v5e
topology: v5e:2x2
jax: 0.10.0
libtpu: 0.0.40
codegen_flags: <defaults>
</compile_context>

<pallas_src>
import math

import jax
import jax.numpy as jnp
from jax.experimental import pallas as pl
from jax.experimental.pallas import tpu as pltpu

_LANES = 1024              # lane-dense width: large multiple of 128
_SUBLANES = 8              # f32 sublane quantum
_DEFAULT_BLOCK_ROWS = 512  # 512 x 1024 f32 = 2 MiB per block


def _sin_cos_comb_kernel(rphi_ref, t_ref, o_ref):
    # rphi_ref: f32 SMEM scalar pair [R, phi] with
    #   a*sin(t) + b*cos(t) == R*sin(t + phi)
    # t_ref / o_ref: lane-dense VMEM tiles.
    r = rphi_ref[0]
    phi = rphi_ref[1]
    t = t_ref[...].astype(jnp.float32)
    o_ref[...] = (r * jnp.sin(t + phi)).astype(o_ref.dtype)


def sin_cos_comb_forward(y, t, a, b, *, block_rows=_DEFAULT_BLOCK_ROWS):
    """Pallas equivalent of sin_cos_comb(a, b).forward(y, t)."""
    del y  # unused by the reference module's forward
    orig_shape = t.shape
    orig_dtype = t.dtype

    # ---- lane-dense re-layout: flatten, pad to a multiple of 8*1024, reshape.
    flat = t.reshape(-1)
    n = flat.shape[0]
    chunk = _SUBLANES * _LANES
    padded_n = ((n + chunk - 1) // chunk) * chunk
    if padded_n != n:
        flat = jnp.pad(flat, (0, padded_n - n))
    rows = padded_n // _LANES            # always a multiple of 8
    t2 = flat.reshape(rows, _LANES)

    # ---- tile sizing: rows and the default block_rows are both multiples of 8,
    #      so min() keeps (8, 128) alignment (or uses the full extent).
    block_rows = min(block_rows, rows)
    grid = (pl.cdiv(rows, block_rows),)

    # ---- fold a, b into (R, phi) once on the host; keep them full-precision f32.
    r = math.hypot(float(a), float(b))
    phi = math.atan2(float(b), float(a))
    rphi = jnp.array([r, phi], dtype=jnp.float32)

    out2 = pl.pallas_call(
        _sin_cos_comb_kernel,
        out_shape=jax.ShapeDtypeStruct((rows, _LANES), orig_dtype),
        grid=grid,
        in_specs=[
            pl.BlockSpec(memory_space=pltpu.SMEM),                 # (R, phi) scalars
            pl.BlockSpec((block_rows, _LANES), lambda i: (i, 0)),  # t tile
        ],
        out_specs=pl.BlockSpec((block_rows, _LANES), lambda i: (i, 0)),
        compiler_params=pltpu.CompilerParams(
            dimension_semantics=("parallel",),
        ),
    )(rphi, t2)

    return out2.reshape(-1)[:n].reshape(orig_shape)


if __name__ == "__main__":
    # Deterministic module parameters (module __init__ takes scalars a, b).
    a = 1.5
    b = -0.75

    key = jax.random.PRNGKey(0)
    ky, kt, kt2 = jax.random.split(key, 3)

    # Primary case: lane-aligned last dim.
    shape = (2, 4, 16, 128)
    y = jax.random.normal(ky, shape, dtype=jnp.float32)
    t = jax.random.normal(kt, shape, dtype=jnp.float32)

    out = sin_cos_comb_forward(y, t, a, b)
    out = jax.block_until_ready(out)
    ref = a * jnp.sin(t) + b * jnp.cos(t)
    assert out.shape == t.shape
    assert jnp.allclose(out, ref, atol=1e-5, rtol=1e-5)

    # Secondary case: awkward (non-128) last dim exercising the pad/un-pad path.
    shape2 = (3, 5, 7)
    t_b = jax.random.normal(kt2, shape2, dtype=jnp.float32)
    out_b = sin_cos_comb_forward(None, t_b, a, b)
    out_b = jax.block_until_ready(out_b)
    ref_b = a * jnp.sin(t_b) + b * jnp.cos(t_b)
    assert out_b.shape == t_b.shape
    assert jnp.allclose(out_b, ref_b, atol=1e-5, rtol=1e-5)

    print("KERNEL_OK")
</pallas_src>

<mosaic_0001>
module attributes {stable_mosaic.version = 11 : i64} {
  func.func @_sin_cos_comb_kernel(%arg0: i32, %arg1: memref<2xf32, #tpu.memory_space<smem>>, %arg2: memref<16x1024xf32, #tpu.memory_space<vmem>>, %arg3: memref<16x1024xf32, #tpu.memory_space<vmem>>) attributes {dimension_semantics = [#tpu.dimension_semantics<parallel>], iteration_bounds = array<i64: 1>, scalar_prefetch = 0 : i64, scratch_operands = 0 : i64, tpu.core_type = #tpu.core_type<tc>, window_params = [{transform_indices = @transform_0, window_bounds = array<i64: 2>}, {transform_indices = @transform_1, window_bounds = array<i64: 16, 1024>}, {transform_indices = @transform_2, window_bounds = array<i64: 16, 1024>}]} {
    %c0 = arith.constant 0 : index
    %0 = memref.load %arg1[%c0] : memref<2xf32, #tpu.memory_space<smem>>
    %c1 = arith.constant 1 : index
    %1 = memref.load %arg1[%c1] : memref<2xf32, #tpu.memory_space<smem>>
    %c0_0 = arith.constant 0 : index
    %c0_1 = arith.constant 0 : index
    %2 = vector.load %arg2[%c0_0, %c0_1] : memref<16x1024xf32, #tpu.memory_space<vmem>>, vector<16x1024xf32>
    %3 = vector.broadcast %1 : f32 to vector<16x1024xf32>
    %4 = arith.addf %2, %3 : vector<16x1024xf32>
    %5 = math.sin %4 : vector<16x1024xf32>
    %6 = vector.broadcast %0 : f32 to vector<16x1024xf32>
    %7 = arith.mulf %6, %5 : vector<16x1024xf32>
    %c0_2 = arith.constant 0 : index
    %c0_3 = arith.constant 0 : index
    %8 = vector.load %arg3[%c0_2, %c0_3] : memref<16x1024xf32, #tpu.memory_space<vmem>>, vector<16x1024xf32>
    tpu.vector_store %arg3[%c0_2, %c0_3], %7 {strides = array<i32>} : memref<16x1024xf32, #tpu.memory_space<vmem>>, vector<16x1024xf32>,
    return
  }
  func.func @transform_0(%arg0: i32) -> i32 {
    %c0_i32 = arith.constant 0 : i32
    %c0_i32_0 = arith.constant 0 : i32
    return %c0_i32 : i32
  }
  func.func @transform_1(%arg0: i32) -> (i32, i32) {
    %c0_i32 = arith.constant 0 : i32
    %c0_i32_0 = arith.constant 0 : i32
    return %arg0, %c0_i32 : i32, i32
  }
  func.func @transform_2(%arg0: i32) -> (i32, i32) {
    %c0_i32 = arith.constant 0 : i32
    %c0_i32_0 = arith.constant 0 : i32
    return %arg0, %c0_i32 : i32, i32
  }
}

</mosaic_0001>

<llo_original>
// kernel: tpu_custom_call.1
$region0: #{tpu_custom_call.1}
  #allocation0 [shape = 'u32[]', space=smem, size = 0x4, offset = 0x4, fixed_abs, tag = 'smem constant byte address 0x4 - core index']
  #allocation1 [shape = 'u32[72,128]{1,0:T(1,128)}', space=vmem, size = 0x9000, scoped, tag = 'internal scratch']
  %s0 = inlined_call_operand.hbm [shape: f32[2], index: 0, kind: input, shape index: {}]
  %s1 = inlined_call_operand.hbm [shape: f32[16,1024], index: 1, kind: input, shape index: {}]
  %s2 = inlined_call_operand.hbm [shape: f32[16,1024], index: 2, kind: output, shape index: {}]
  %s3 = sld [smem:[#allocation0]]
  $region26: #{tpu_custom_call.1} parent=0
    _
  %s5 = ssub.s32 1, %s3
  %s6 = scalar_select 0, %s5, %s3
  $region1: #{tpu_custom_call.1} parent=0
    #allocation2 [shape = 'u8[512]{0}', space=smem, size = 0x200, scoped, tag = 'input window, operand 0, single buffered']
    #allocation3 [shape = 's32[1]{0}', space=sflag, size = 0x4, scoped, tag = 'scoped memory for tpu_custom_call.1']
    #allocation4 [shape = 's32[1]{0}', space=sflag, size = 0x4, scoped, tag = 'scoped memory for tpu_custom_call.1']
    #allocation5 [shape = 's32[1]{0}', space=sflag, size = 0x4, scoped, tag = 'scoped memory for tpu_custom_call.1']
    #allocation6 [shape = 'u8[65536]{0}', space=vmem, size = 0x10000, scoped, tag = 'input window, operand 1, single buffered']
    #allocation7 [shape = 'u8[65536]{0}', space=vmem, size = 0x10000, scoped, tag = 'output window, operand 0, single buffered']
    %7 = vsyncpa [#allocation5], 0
    %8 = vsyncpa [#allocation3], 0
    %9 = vsyncpa [#allocation4], 0
    // Predicated region
    $region2: #{tpu_custom_call.1} parent=1 // pred_check
      _
    $region3: #{tpu_custom_call.1} parent=1 // pred_check_branch
      %11 = sbr.rel (0) target = $region5
    $region4: #{tpu_custom_call.1} parent=1 // pred_region
      %13 = vsyncadd [#allocation5], 0
      %s15 = sshll.u32 %s0, 4
      %s16 = int_to_ptr.hbm [resolvable:$true] %s15
      %18 = dma.hbm_to_smem %s16, 16, [#allocation2], [#allocation5]
    $region5: #{tpu_custom_call.1} parent=1 // pred_fallthru
      _
    // Predicated region
    $region6: #{tpu_custom_call.1} parent=1 // pred_check
      _
    $region7: #{tpu_custom_call.1} parent=1 // pred_check_branch
      %20 = sbr.rel (0) target = $region9
    $region8: #{tpu_custom_call.1} parent=1 // pred_region
      %22 = vsyncadd [#allocation3], 0
      %s23 = sshll.u32 %s1, 4
      %s24 = int_to_ptr.hbm [resolvable:$true] %s23
      %s25 = sshll.u32 [#allocation6], 4
      %s26 = int_to_ptr.vmem [resolvable:$true] %s25
      %31 = dma.hbm_to_vmem [thread:$0]  %s24, 2048, %s26, [#allocation3], 1024, 1024, 64
    $region9: #{tpu_custom_call.1} parent=1 // pred_fallthru
      _
    // Predicated region
    $region10: #{tpu_custom_call.1} parent=1 // pred_check
      _
    $region11: #{tpu_custom_call.1} parent=1 // pred_check_branch
      %33 = sbr.rel (0) target = $region13
    $region12: #{tpu_custom_call.1} parent=1 // pred_region
      %35 = dma.done [#allocation5], 16
    $region13: #{tpu_custom_call.1} parent=1 // pred_fallthru
      _
    // Predicated region
    $region14: #{tpu_custom_call.1} parent=1 // pred_check
      _
    $region15: #{tpu_custom_call.1} parent=1 // pred_check_branch
      %37 = sbr.rel (0) target = $region17
    $region16: #{tpu_custom_call.1} parent=1 // pred_region
      %39 = dma.done [#allocation3], 2048
    $region17: #{tpu_custom_call.1} parent=1 // pred_fallthru
      _
    %40 = sfence
    %s41 = sld [smem:[#allocation2]]
    %s42 = sld [smem:[#allocation2 + $0x1]]
    %v43 = vld [vmem:[#allocation6] sm:$0xff]
    %v44 = vld [vmem:[#allocation6 + $0x8] sm:$0xff]
    %v45 = vld [vmem:[#allocation6 + $0x10] sm:$0xff]
    %v46 = vld [vmem:[#allocation6 + $0x18] sm:$0xff]
    %v47 = vld [vmem:[#allocation6 + $0x20] sm:$0xff]
    %v48 = vld [vmem:[#allocation6 + $0x28] sm:$0xff]
    %v49 = vld [vmem:[#allocation6 + $0x30] sm:$0xff]
    %v50 = vld [vmem:[#allocation6 + $0x38] sm:$0xff]
    %v51 = vld [vmem:[#allocation6 + $0x40] sm:$0xff]
    %v52 = vld [vmem:[#allocation6 + $0x48] sm:$0xff]
    %v53 = vld [vmem:[#allocation6 + $0x50] sm:$0xff]
    %v54 = vld [vmem:[#allocation6 + $0x58] sm:$0xff]
    %v55 = vld [vmem:[#allocation6 + $0x60] sm:$0xff]
    %v56 = vld [vmem:[#allocation6 + $0x68] sm:$0xff]
    %v57 = vld [vmem:[#allocation6 + $0x70] sm:$0xff]
    %v58 = vld [vmem:[#allocation6 + $0x78] sm:$0xff]
    %v59 = vstv %s42
    %v60 = vadd.f32 %v43, %v59
    %v61 = vadd.f32 %v44, %v59
    %v62 = vadd.f32 %v45, %v59
    %v63 = vadd.f32 %v46, %v59
    %v64 = vadd.f32 %v47, %v59
    %v65 = vadd.f32 %v48, %v59
    %v66 = vadd.f32 %v49, %v59
    %v67 = vadd.f32 %v50, %v59
    %v68 = vadd.f32 %v51, %v59
    %v69 = vadd.f32 %v52, %v59
    %v70 = vadd.f32 %v53, %v59
    %v71 = vadd.f32 %v54, %v59
    %v72 = vadd.f32 %v55, %v59
    %v73 = vadd.f32 %v56, %v59
    %v74 = vadd.f32 %v57, %v59
    %v75 = vadd.f32 %v58, %v59
    %v76 = vand.u32 2147483647, %v60
    %vm77 = vcmp.le.f32.partialorder %v76, 0.7853982
    %vm78 = vcmp.lt.s32.totalorder %v60, 0
    %v79 = vand.u32 %v60, 2139095040
    %v80 = vshrl.u32 %v79, 23
    %v81 = vsub.s32 %v80, 127
    %v82 = vand.u32 2147483647, %v60
    %v83 = vand.u32 %v82, 8388607
    %v84 = vor.u32 %v83, 8388608
    %v85 = vsub.s32 0, %v84
    %v86 = vadd.s32 %v81, 1
    %vm87 = vcmp.gt.s32.totalorder %v86, 0
    %v88 = vsel %vm87, %v86, 0
    %v89 = vshrl.u32 %v88, 5
    %v90 = vand.u32 %v88, 31
    %v91 = vsub.s32 32, %v90
    %v92 = vshrl.u32 683565275, %v91
    %v93 = vshll.u32 683565275, %v90
    %v94 = vshrl.u32 2475754826, %v91
    %v95 = vor.u32 %v93, %v94
    %v96 = vshll.u32 2475754826, %v90
    %v97 = vshrl.u32 2131351028, %v91
    %v98 = vor.u32 %v96, %v97
    %v99 = vshll.u32 2131351028, %v90
    %v100 = vshrl.u32 2102212464, %v91
    %v101 = vor.u32 %v99, %v100
    %v102 = vshll.u32 2102212464, %v90
    %v103 = vshrl.u32 920167782, %v91
    %v104 = vor.u32 %v102, %v103
    %v105 = vshll.u32 920167782, %v90
    %v106 = vshrl.u32 1326507024, %v91
    %v107 = vor.u32 %v105, %v106
    %vm108 = vcmp.lt.s32.totalorder %v89, 1
    %vm109 = vcmp.lt.s32.totalorder %v89, 2
    %vm110 = vcmp.lt.s32.totalorder %v89, 3
    %vm111 = vcmp.lt.s32.totalorder %v89, 4
    %v112 = vsel %vm108, %v92, %v95
    %v113 = vsel %vm111, %v101, 2102212464
    %v114 = vsel %vm110, %v98, %v113
    %v115 = vsel %vm109, %v112, %v114
    %v116 = vsel %vm108, %v95, %v98
    %v117 = vsel %vm111, %v104, 920167782
    %v118 = vsel %vm110, %v101, %v117
    %v119 = vsel %vm109, %v116, %v118
    %v120 = vsel %vm108, %v98, %v101
    %v121 = vsel %vm111, %v107, 1326507024
    %v122 = vsel %vm110, %v104, %v121
    %v123 = vsel %vm109, %v120, %v122
    %v124 = vshll.u32 %v84, 8
    %v125 = vand.u32 %v124, 65535
    %v126 = vshrl.u32 %v124, 16
    %v127 = vand.u32 %v123, 65535
    %v128 = vshrl.u32 %v123, 16
    %v129 = vmul.u32 %v125, %v127
    %v130 = vmul.u32 %v125, %v128
    %v131 = vmul.u32 %v126, %v127
    %v132 = vmul.u32 %v126, %v128
    %v133 = vshll.u32 %v130, 16
    %v134 = vshrl.u32 %v130, 16
    %v135 = vshll.u32 %v131, 16
    %v136 = vshrl.u32 %v131, 16
    %vm137 = vc.u32 %v129, %v133
    %v138 = vsel %vm137, 1, 0
    %v139 = vadd.s32 %v129, %v133
    %v140 = vadd.s32 %v132, %v138
    %vm141 = vc.u32 %v139, %v135
    %v142 = vsel %vm141, 1, 0
    %v143 = vadd.s32 %v139, %v135
    %v144 = vadd.s32 %v140, %v142
    %v145 = vadd.s32 %v144, %v134
    %v146 = vadd.s32 %v145, %v136
    %v147 = vand.u32 %v124, 65535
    %v148 = vshrl.u32 %v124, 16
    %v149 = vand.u32 %v119, 65535
    %v150 = vshrl.u32 %v119, 16
    %v151 = vmul.u32 %v147, %v149
    %v152 = vmul.u32 %v147, %v150
    %v153 = vmul.u32 %v148, %v149
    %v154 = vmul.u32 %v148, %v150
    %v155 = vshll.u32 %v152, 16
    %v156 = vshrl.u32 %v152, 16
    %v157 = vshll.u32 %v153, 16
    %v158 = vshrl.u32 %v153, 16
    %vm159 = vc.u32 %v151, %v155
    %v160 = vsel %vm159, 1, 0
    %v161 = vadd.s32 %v151, %v155
    %v162 = vadd.s32 %v154, %v160
    %vm163 = vc.u32 %v161, %v157
    %v164 = vsel %vm163, 1, 0
    %v165 = vadd.s32 %v161, %v157
    %v166 = vadd.s32 %v162, %v164
    %v167 = vadd.s32 %v166, %v156
    %v168 = vadd.s32 %v167, %v158
    %v169 = vmul.u32 %v124, %v115
    %v170 = vadd.s32 %v146, %v165
    %vm171 = vc.u32 %v146, %v165
    %v172 = vadd.s32 %v168, 1
    %v173 = vsel %vm171, %v172, %v168
    %v174 = vadd.s32 %v169, %v173
    %v175 = vadd.s32 %v174, 536870912
    %v176 = vshrl.u32 %v175, 30
    %v177 = vshll.u32 %v176, 30
    %v178 = vsub.s32 %v174, %v177
    %vm179 = vcmp.lt.s32.totalorder %v178, 0
    %v180 = vsub.s32 0, %v178
    %v181 = vsel %vm179, %v180, %v178
    %v182 = vclz %v181
    %v183 = vsub.s32 %v182, 2
    %vm184 = vcmp.gt.s32.totalorder 0, %v183
    %v185 = vsel %vm184, 0, %v183
    %v186 = vsub.s32 32, %v185
    %v187 = vshll.u32 %v178, %v185
    %v188 = vshrl.u32 %v170, %v186
    %v189 = vor.u32 %v187, %v188
    %v190 = vsub.s32 4294967266, %v185
    %v191 = vadd.s32 %v190, 127
    %v192 = vshll.u32 %v191, 23
    %v193 = vor.u32 4788187, %v192
    %v194 = vand.u32 2147483647, %v193
    %v196 = vcvt.s32.f32 %v189
    %v197 = vmul.f32 %v196, %v194
    %v198 = vxor.u32 %v197, 2147483648
    %v199 = vsel %vm78, %v198, %v197
    %v200 = vsub.s32 4, %v176
    %v201 = vsel %vm78, %v200, %v176
    %v202 = vsel %vm77, %v60, %v199
    %v203 = vsel %vm77, 0, %v201
    %v204 = vmul.f32 %v202, %v202
    %v205 = vmul.f32 %v204, -0.001358992
    %v206 = vadd.f32 %v205, 0.041655596
    %v207 = vmul.f32 %v204, %v206
    %v208 = vadd.f32 %v207, -0.4999988
    %v209 = vmul.f32 %v204, %v208
    %v210 = vadd.f32 1.0, %v209
    %v211 = vmul.f32 %v202, %v202
    %v212 = vmul.f32 %v211, -0.00019511016
    %v213 = vadd.f32 %v212, 0.008332121
    %v214 = vmul.f32 %v211, %v213
    %v215 = vadd.f32 %v214, -0.16666654
    %v216 = vmul.f32 %v211, %v215
    %v217 = vadd.f32 %v216, 1.0
    %v218 = vmul.f32 %v217, %v202
    %vm219 = vweird.f32 %v60
    %v220 = vadd.s32 %v203, 3
    %v221 = vand.u32 %v220, 3
    %vm222 = vcmp.lt.s32.totalorder %v221, 2
    %vm223 = vcmp.eq.s32.totalorder %v221, 0
    %v224 = vxor.u32 %v218, 2147483648
    %v225 = vsel %vm223, %v210, %v224
    %vm226 = vcmp.eq.s32.totalorder %v221, 2
    %v227 = vxor.u32 %v210, 2147483648
    %v228 = vsel %vm226, %v227, %v218
    %v229 = vsel %vm222, %v225, %v228
    %v230 = vsel %vm219, nan, %v229
    %v231 = vand.u32 2147483647, %v61
    %vm232 = vcmp.le.f32.partialorder %v231, 0.7853982
    %vm233 = vcmp.lt.s32.totalorder %v61, 0
    %v234 = vand.u32 %v61, 2139095040
    %v235 = vshrl.u32 %v234, 23
    %v236 = vsub.s32 %v235, 127
    %v237 = vand.u32 2147483647, %v61
    %v238 = vand.u32 %v237, 8388607
    %v239 = vor.u32 %v238, 8388608
    %v240 = vsub.s32 0, %v239
    %v241 = vadd.s32 %v236, 1
    %vm242 = vcmp.gt.s32.totalorder %v241, 0
    %v243 = vsel %vm242, %v241, 0
    %v244 = vshrl.u32 %v243, 5
    %v245 = vand.u32 %v243, 31
    %v246 = vsub.s32 32, %v245
    %v247 = vshrl.u32 683565275, %v246
    %v248 = vshll.u32 683565275, %v245
    %v249 = vshrl.u32 2475754826, %v246
    %v250 = vor.u32 %v248, %v249
    %v251 = vshll.u32 2475754826, %v245
    %v252 = vshrl.u32 2131351028, %v246
    %v253 = vor.u32 %v251, %v252
    %v254 = vshll.u32 2131351028, %v245
    %v255 = vshrl.u32 2102212464, %v246
    %v256 = vor.u32 %v254, %v255
    %v257 = vshll.u32 2102212464, %v245
    %v258 = vshrl.u32 920167782, %v246
    %v259 = vor.u32 %v257, %v258
    %v260 = vshll.u32 920167782, %v245
    %v261 = vshrl.u32 1326507024, %v246
    %v262 = vor.u32 %v260, %v261
    %vm263 = vcmp.lt.s32.totalorder %v244, 1
    %vm264 = vcmp.lt.s32.totalorder %v244, 2
    %vm265 = vcmp.lt.s32.totalorder %v244, 3
    %vm266 = vcmp.lt.s32.totalorder %v244, 4
    %v267 = vsel %vm263, %v247, %v250
    %v268 = vsel %vm266, %v256, 2102212464
    %v269 = vsel %vm265, %v253, %v268
    %v270 = vsel %vm264, %v267, %v269
    %v271 = vsel %vm263, %v250, %v253
    %v272 = vsel %vm266, %v259, 920167782
    %v273 = vsel %vm265, %v256, %v272
    %v274 = vsel %vm264, %v271, %v273
    %v275 = vsel %vm263, %v253, %v256
    %v276 = vsel %vm266, %v262, 1326507024
    %v277 = vsel %vm265, %v259, %v276
    %v278 = vsel %vm264, %v275, %v277
    %v279 = vshll.u32 %v239, 8
    %v280 = vand.u32 %v279, 65535
    %v281 = vshrl.u32 %v279, 16
    %v282 = vand.u32 %v278, 65535
    %v283 = vshrl.u32 %v278, 16
    %v284 = vmul.u32 %v280, %v282
    %v285 = vmul.u32 %v280, %v283
    %v286 = vmul.u32 %v281, %v282
    %v287 = vmul.u32 %v281, %v283
    %v288 = vshll.u32 %v285, 16
    %v289 = vshrl.u32 %v285, 16
    %v290 = vshll.u32 %v286, 16
    %v291 = vshrl.u32 %v286, 16
    %vm292 = vc.u32 %v284, %v288
    %v293 = vsel %vm292, 1, 0
    %v294 = vadd.s32 %v284, %v288
    %v295 = vadd.s32 %v287, %v293
    %vm296 = vc.u32 %v294, %v290
    %v297 = vsel %vm296, 1, 0
    %v298 = vadd.s32 %v294, %v290
    %v299 = vadd.s32 %v295, %v297
    %v300 = vadd.s32 %v299, %v289
    %v301 = vadd.s32 %v300, %v291
    %v302 = vand.u32 %v279, 65535
    %v303 = vshrl.u32 %v279, 16
    %v304 = vand.u32 %v274, 65535
    %v305 = vshrl.u32 %v274, 16
    %v306 = vmul.u32 %v302, %v304
    %v307 = vmul.u32 %v302, %v305
    %v308 = vmul.u32 %v303, %v304
    %v309 = vmul.u32 %v303, %v305
    %v310 = vshll.u32 %v307, 16
    %v311 = vshrl.u32 %v307, 16
    %v312 = vshll.u32 %v308, 16
    %v313 = vshrl.u32 %v308, 16
    %vm314 = vc.u32 %v306, %v310
    %v315 = vsel %vm314, 1, 0
    %v316 = vadd.s32 %v306, %v310
    %v317 = vadd.s32 %v309, %v315
    %vm318 = vc.u32 %v316, %v312
    %v319 = vsel %vm318, 1, 0
    %v320 = vadd.s32 %v316, %v312
    %v321 = vadd.s32 %v317, %v319
    %v322 = vadd.s32 %v321, %v311
    %v323 = vadd.s32 %v322, %v313
    %v324 = vmul.u32 %v279, %v270
    %v325 = vadd.s32 %v301, %v320
    %vm326 = vc.u32 %v301, %v320
    %v327 = vadd.s32 %v323, 1
    %v328 = vsel %vm326, %v327, %v323
    %v329 = vadd.s32 %v324, %v328
    %v330 = vadd.s32 %v329, 536870912
    %v331 = vshrl.u32 %v330, 30
    %v332 = vshll.u32 %v331, 30
    %v333 = vsub.s32 %v329, %v332
    %vm334 = vcmp.lt.s32.totalorder %v333, 0
    %v335 = vsub.s32 0, %v333
    %v336 = vsel %vm334, %v335, %v333
    %v337 = vclz %v336
    %v338 = vsub.s32 %v337, 2
    %vm339 = vcmp.gt.s32.totalorder 0, %v338
    %v340 = vsel %vm339, 0, %v338
    %v341 = vsub.s32 32, %v340
    %v342 = vshll.u32 %v333, %v340
    %v343 = vshrl.u32 %v325, %v341
    %v344 = vor.u32 %v342, %v343
    %v345 = vsub.s32 4294967266, %v340
    %v346 = vadd.s32 %v345, 127
    %v347 = vshll.u32 %v346, 23
    %v348 = vor.u32 4788187, %v347
    %v349 = vand.u32 2147483647, %v348
    %v351 = vcvt.s32.f32 %v344
    %v352 = vmul.f32 %v351, %v349
    %v353 = vxor.u32 %v352, 2147483648
    %v354 = vsel %vm233, %v353, %v352
    %v355 = vsub.s32 4, %v331
    %v356 = vsel %vm233, %v355, %v331
    %v357 = vsel %vm232, %v61, %v354
    %v358 = vsel %vm232, 0, %v356
    %v359 = vmul.f32 %v357, %v357
    %v360 = vmul.f32 %v359, -0.001358992
    %v361 = vadd.f32 %v360, 0.041655596
    %v362 = vmul.f32 %v359, %v361
    %v363 = vadd.f32 %v362, -0.4999988
    %v364 = vmul.f32 %v359, %v363
    %v365 = vadd.f32 1.0, %v364
    %v366 = vmul.f32 %v357, %v357
    %v367 = vmul.f32 %v366, -0.00019511016
    %v368 = vadd.f32 %v367, 0.008332121
    %v369 = vmul.f32 %v366, %v368
    %v370 = vadd.f32 %v369, -0.16666654
    %v371 = vmul.f32 %v366, %v370
    %v372 = vadd.f32 %v371, 1.0
    %v373 = vmul.f32 %v372, %v357
    %vm374 = vweird.f32 %v61
    %v375 = vadd.s32 %v358, 3
    %v376 = vand.u32 %v375, 3
    %vm377 = vcmp.lt.s32.totalorder %v376, 2
    %vm378 = vcmp.eq.s32.totalorder %v376, 0
    %v379 = vxor.u32 %v373, 2147483648
    %v380 = vsel %vm378, %v365, %v379
    %vm381 = vcmp.eq.s32.totalorder %v376, 2
    %v382 = vxor.u32 %v365, 2147483648
    %v383 = vsel %vm381, %v382, %v373
    %v384 = vsel %vm377, %v380, %v383
    %v385 = vsel %vm374, nan, %v384
    %v386 = vand.u32 2147483647, %v62
    %vm387 = vcmp.le.f32.partialorder %v386, 0.7853982
    %vm388 = vcmp.lt.s32.totalorder %v62, 0
    %v389 = vand.u32 %v62, 2139095040
    %v390 = vshrl.u32 %v389, 23
    %v391 = vsub.s32 %v390, 127
    %v392 = vand.u32 2147483647, %v62
    %v393 = vand.u32 %v392, 8388607
    %v394 = vor.u32 %v393, 8388608
    %v395 = vsub.s32 0, %v394
    %v396 = vadd.s32 %v391, 1
    %vm397 = vcmp.gt.s32.totalorder %v396, 0
    %v398 = vsel %vm397, %v396, 0
    %v399 = vshrl.u32 %v398, 5
    %v400 = vand.u32 %v398, 31
    %v401 = vsub.s32 32, %v400
    %v402 = vshrl.u32 683565275, %v401
    %v403 = vshll.u32 683565275, %v400
    %v404 = vshrl.u32 2475754826, %v401
    %v405 = vor.u32 %v403, %v404
    %v406 = vshll.u32 2475754826, %v400
    %v407 = vshrl.u32 2131351028, %v401
    %v408 = vor.u32 %v406, %v407
    %v409 = vshll.u32 2131351028, %v400
    %v410 = vshrl.u32 2102212464, %v401
    %v411 = vor.u32 %v409, %v410
    %v412 = vshll.u32 2102212464, %v400
    %v413 = vshrl.u32 920167782, %v401
    %v414 = vor.u32 %v412, %v413
    %v415 = vshll.u32 920167782, %v400
    %v416 = vshrl.u32 1326507024, %v401
    %v417 = vor.u32 %v415, %v416
    %vm418 = vcmp.lt.s32.totalorder %v399, 1
    %vm419 = vcmp.lt.s32.totalorder %v399, 2
    %vm420 = vcmp.lt.s32.totalorder %v399, 3
    %vm421 = vcmp.lt.s32.totalorder %v399, 4
    %v422 = vsel %vm418, %v402, %v405
    %v423 = vsel %vm421, %v411, 2102212464
    %v424 = vsel %vm420, %v408, %v423
    %v425 = vsel %vm419, %v422, %v424
    %v426 = vsel %vm418, %v405, %v408
    %v427 = vsel %vm421, %v414, 920167782
    %v428 = vsel %vm420, %v411, %v427
    %v429 = vsel %vm419, %v426, %v428
    %v430 = vsel %vm418, %v408, %v411
    %v431 = vsel %vm421, %v417, 1326507024
    %v432 = vsel %vm420, %v414, %v431
    %v433 = vsel %vm419, %v430, %v432
    %v434 = vshll.u32 %v394, 8
    %v435 = vand.u32 %v434, 65535
    %v436 = vshrl.u32 %v434, 16
    %v437 = vand.u32 %v433, 65535
    %v438 = vshrl.u32 %v433, 16
    %v439 = vmul.u32 %v435, %v437
    %v440 = vmul.u32 %v435, %v438
    %v441 = vmul.u32 %v436, %v437
    %v442 = vmul.u32 %v436, %v438
    %v443 = vshll.u32 %v440, 16
    %v444 = vshrl.u32 %v440, 16
    %v445 = vshll.u32 %v441, 16
    %v446 = vshrl.u32 %v441, 16
    %vm447 = vc.u32 %v439, %v443
    %v448 = vsel %vm447, 1, 0
    %v449 = vadd.s32 %v439, %v443
    %v450 = vadd.s32 %v442, %v448
    %vm451 = vc.u32 %v449, %v445
    %v452 = vsel %vm451, 1, 0
    %v453 = vadd.s32 %v449, %v445
    %v454 = vadd.s32 %v450, %v452
    %v455 = vadd.s32 %v454, %v444
    %v456 = vadd.s32 %v455, %v446
    %v457 = vand.u32 %v434, 65535
    %v458 = vshrl.u32 %v434, 16
    %v459 = vand.u32 %v429, 65535
    %v460 = vshrl.u32 %v429, 16
    %v461 = vmul.u32 %v457, %v459
    %v462 = vmul.u32 %v457, %v460
    %v463 = vmul.u32 %v458, %v459
    %v464 = vmul.u32 %v458, %v460
    %v465 = vshll.u32 %v462, 16
    %v466 = vshrl.u32 %v462, 16
    %v467 = vshll.u32 %v463, 16
    %v468 = vshrl.u32 %v463, 16
    %vm469 = vc.u32 %v461, %v465
    %v470 = vsel %vm469, 1, 0
    %v471 = vadd.s32 %v461, %v465
    %v472 = vadd.s32 %v464, %v470
    %vm473 = vc.u32 %v471, %v467
    %v474 = vsel %vm473, 1, 0
    %v475 = vadd.s32 %v471, %v467
    %v476 = vadd.s32 %v472, %v474
    %v477 = vadd.s32 %v476, %v466
    %v478 = vadd.s32 %v477, %v468
    %v479 = vmul.u32 %v434, %v425
    %v480 = vadd.s32 %v456, %v475
    %vm481 = vc.u32 %v456, %v475
    %v482 = vadd.s32 %v478, 1
    %v483 = vsel %vm481, %v482, %v478
    %v484 = vadd.s32 %v479, %v483
    %v485 = vadd.s32 %v484, 536870912
    %v486 = vshrl.u32 %v485, 30
    %v487 = vshll.u32 %v486, 30
    %v488 = vsub.s32 %v484, %v487
    %vm489 = vcmp.lt.s32.totalorder %v488, 0
    %v490 = vsub.s32 0, %v488
    %v491 = vsel %vm489, %v490, %v488
    %v492 = vclz %v491
    %v493 = vsub.s32 %v492, 2
    %vm494 = vcmp.gt.s32.totalorder 0, %v493
    %v495 = vsel %vm494, 0, %v493
    %v496 = vsub.s32 32, %v495
    %v497 = vshll.u32 %v488, %v495
    %v498 = vshrl.u32 %v480, %v496
    %v499 = vor.u32 %v497, %v498
    %v500 = vsub.s32 4294967266, %v495
    %v501 = vadd.s32 %v500, 127
    %v502 = vshll.u32 %v501, 23
    %v503 = vor.u32 4788187, %v502
    %v504 = vand.u32 2147483647, %v503
    %v506 = vcvt.s32.f32 %v499
    %v507 = vmul.f32 %v506, %v504
    %v508 = vxor.u32 %v507, 2147483648
    %v509 = vsel %vm388, %v508, %v507
    %v510 = vsub.s32 4, %v486
    %v511 = vsel %vm388, %v510, %v486
    %v512 = vsel %vm387, %v62, %v509
    %v513 = vsel %vm387, 0, %v511
    %v514 = vmul.f32 %v512, %v512
    %v515 = vmul.f32 %v514, -0.001358992
    %v516 = vadd.f32 %v515, 0.041655596
    %v517 = vmul.f32 %v514, %v516
    %v518 = vadd.f32 %v517, -0.4999988
    %v519 = vmul.f32 %v514, %v518
    %v520 = vadd.f32 1.0, %v519
    %v521 = vmul.f32 %v512, %v512
    %v522 = vmul.f32 %v521, -0.00019511016
    %v523 = vadd.f32 %v522, 0.008332121
    %v524 = vmul.f32 %v521, %v523
    %v525 = vadd.f32 %v524, -0.16666654
    %v526 = vmul.f32 %v521, %v525
    %v527 = vadd.f32 %v526, 1.0
    %v528 = vmul.f32 %v527, %v512
    %vm529 = vweird.f32 %v62
    %v530 = vadd.s32 %v513, 3
    %v531 = vand.u32 %v530, 3
    %vm532 = vcmp.lt.s32.totalorder %v531, 2
    %vm533 = vcmp.eq.s32.totalorder %v531, 0
    %v534 = vxor.u32 %v528, 2147483648
    %v535 = vsel %vm533, %v520, %v534
    %vm536 = vcmp.eq.s32.totalorder %v531, 2
    %v537 = vxor.u32 %v520, 2147483648
    %v538 = vsel %vm536, %v537, %v528
    %v539 = vsel %vm532, %v535, %v538
    %v540 = vsel %vm529, nan, %v539
    %v541 = vand.u32 2147483647, %v63
    %vm542 = vcmp.le.f32.partialorder %v541, 0.7853982
    %vm543 = vcmp.lt.s32.totalorder %v63, 0
    %v544 = vand.u32 %v63, 2139095040
    %v545 = vshrl.u32 %v544, 23
    %v546 = vsub.s32 %v545, 127
    %v547 = vand.u32 2147483647, %v63
    %v548 = vand.u32 %v547, 8388607
    %v549 = vor.u32 %v548, 8388608
    %v550 = vsub.s32 0, %v549
    %v551 = vadd.s32 %v546, 1
    %vm552 = vcmp.gt.s32.totalorder %v551, 0
    %v553 = vsel %vm552, %v551, 0
    %v554 = vshrl.u32 %v553, 5
    %v555 = vand.u32 %v553, 31
    %v556 = vsub.s32 32, %v555
    %v557 = vshrl.u32 683565275, %v556
    %v558 = vshll.u32 683565275, %v555
    %v559 = vshrl.u32 2475754826, %v556
    %v560 = vor.u32 %v558, %v559
    %v561 = vshll.u32 2475754826, %v555
    %v562 = vshrl.u32 2131351028, %v556
    %v563 = vor.u32 %v561, %v562
    %v564 = vshll.u32 2131351028, %v555
    %v565 = vshrl.u32 2102212464, %v556
    %v566 = vor.u32 %v564, %v565
    %v567 = vshll.u32 2102212464, %v555
    %v568 = vshrl.u32 920167782, %v556
    %v569 = vor.u32 %v567, %v568
    %v570 = vshll.u32 920167782, %v555
    %v571 = vshrl.u32 1326507024, %v556
    %v572 = vor.u32 %v570, %v571
    %vm573 = vcmp.lt.s32.totalorder %v554, 1
    %vm574 = vcmp.lt.s32.totalorder %v554, 2
    %vm575 = vcmp.lt.s32.totalorder %v554, 3
    %vm576 = vcmp.lt.s32.totalorder %v554, 4
    %v577 = vsel %vm573, %v557, %v560
    %v578 = vsel %vm576, %v566, 2102212464
    %v579 = vsel %vm575, %v563, %v578
    %v580 = vsel %vm574, %v577, %v579
    %v581 = vsel %vm573, %v560, %v563
    %v582 = vsel %vm576, %v569, 920167782
    %v583 = vsel %vm575, %v566, %v582
    %v584 = vsel %vm574, %v581, %v583
    %v585 = vsel %vm573, %v563, %v566
    %v586 = vsel %vm576, %v572, 1326507024
    %v587 = vsel %vm575, %v569, %v586
    %v588 = vsel %vm574, %v585, %v587
    %v589 = vshll.u32 %v549, 8
    %v590 = vand.u32 %v589, 65535
    %v591 = vshrl.u32 %v589, 16
    %v592 = vand.u32 %v588, 65535
    %v593 = vshrl.u32 %v588, 16
    %v594 = vmul.u32 %v590, %v592
    %v595 = vmul.u32 %v590, %v593
    %v596 = vmul.u32 %v591, %v592
    %v597 = vmul.u32 %v591, %v593
    %v598 = vshll.u32 %v595, 16
    %v599 = vshrl.u32 %v595, 16
    %v600 = vshll.u32 %v596, 16
    %v601 = vshrl.u32 %v596, 16
    %vm602 = vc.u32 %v594, %v598
    %v603 = vsel %vm602, 1, 0
    %v604 = vadd.s32 %v594, %v598
    %v605 = vadd.s32 %v597, %v603
    %vm606 = vc.u32 %v604, %v600
    %v607 = vsel %vm606, 1, 0
    %v608 = vadd.s32 %v604, %v600
    %v609 = vadd.s32 %v605, %v607
    %v610 = vadd.s32 %v609, %v599
    %v611 = vadd.s32 %v610, %v601
    %v612 = vand.u32 %v589, 65535
    %v613 = vshrl.u32 %v589, 16
    %v614 = vand.u32 %v584, 65535
    %v615 = vshrl.u32 %v584, 16
    %v616 = vmul.u32 %v612, %v614
    %v617 = vmul.u32 %v612, %v615
    %v618 = vmul.u32 %v613, %v614
    %v619 = vmul.u32 %v613, %v615
    %v620 = vshll.u32 %v617, 16
    %v621 = vshrl.u32 %v617, 16
    %v622 = vshll.u32 %v618, 16
    %v623 = vshrl.u32 %v618, 16
    %vm624 = vc.u32 %v616, %v620
    %v625 = vsel %vm624, 1, 0
    %v626 = vadd.s32 %v616, %v620
    %v627 = vadd.s32 %v619, %v625
    %vm628 = vc.u32 %v626, %v622
    %v629 = vsel %vm628, 1, 0
    %v630 = vadd.s32 %v626, %v622
    %v631 = vadd.s32 %v627, %v629
    %v632 = vadd.s32 %v631, %v621
    %v633 = vadd.s32 %v632, %v623
    %v634 = vmul.u32 %v589, %v580
    %v635 = vadd.s32 %v611, %v630
    %vm636 = vc.u32 %v611, %v630
    %v637 = vadd.s32 %v633, 1
    %v638 = vsel %vm636, %v637, %v633
    %v639 = vadd.s32 %v634, %v638
    %v640 = vadd.s32 %v639, 536870912
    %v641 = vshrl.u32 %v640, 30
    %v642 = vshll.u32 %v641, 30
    %v643 = vsub.s32 %v639, %v642
    %vm644 = vcmp.lt.s32.totalorder %v643, 0
    %v645 = vsub.s32 0, %v643
    %v646 = vsel %vm644, %v645, %v643
    %v647 = vclz %v646
    %v648 = vsub.s32 %v647, 2
    %vm649 = vcmp.gt.s32.totalorder 0, %v648
    %v650 = vsel %vm649, 0, %v648
    %v651 = vsub.s32 32, %v650
    %v652 = vshll.u32 %v643, %v650
    %v653 = vshrl.u32 %v635, %v651
    %v654 = vor.u32 %v652, %v653
    %v655 = vsub.s32 4294967266, %v650
    %v656 = vadd.s32 %v655, 127
    %v657 = vshll.u32 %v656, 23
    %v658 = vor.u32 4788187, %v657
    %v659 = vand.u32 2147483647, %v658
    %v661 = vcvt.s32.f32 %v654
    %v662 = vmul.f32 %v661, %v659
    %v663 = vxor.u32 %v662, 2147483648
    %v664 = vsel %vm543, %v663, %v662
    %v665 = vsub.s32 4, %v641
    %v666 = vsel %vm543, %v665, %v641
    %v667 = vsel %vm542, %v63, %v664
    %v668 = vsel %vm542, 0, %v666
    %v669 = vmul.f32 %v667, %v667
    %v670 = vmul.f32 %v669, -0.001358992
    %v671 = vadd.f32 %v670, 0.041655596
    %v672 = vmul.f32 %v669, %v671
    %v673 = vadd.f32 %v672, -0.4999988
    %v674 = vmul.f32 %v669, %v673
    %v675 = vadd.f32 1.0, %v674
    %v676 = vmul.f32 %v667, %v667
    %v677 = vmul.f32 %v676, -0.00019511016
    %v678 = vadd.f32 %v677, 0.008332121
    %v679 = vmul.f32 %v676, %v678
    %v680 = vadd.f32 %v679, -0.16666654
    %v681 = vmul.f32 %v676, %v680
    %v682 = vadd.f32 %v681, 1.0
    %v683 = vmul.f32 %v682, %v667
    %vm684 = vweird.f32 %v63
    %v685 = vadd.s32 %v668, 3
    %v686 = vand.u32 %v685, 3
    %vm687 = vcmp.lt.s32.totalorder %v686, 2
    %vm688 = vcmp.eq.s32.totalorder %v686, 0
    %v689 = vxor.u32 %v683, 2147483648
    %v690 = vsel %vm688, %v675, %v689
    %vm691 = vcmp.eq.s32.totalorder %v686, 2
    %v692 = vxor.u32 %v675, 2147483648
    %v693 = vsel %vm691, %v692, %v683
    %v694 = vsel %vm687, %v690, %v693
    %v695 = vsel %vm684, nan, %v694
    %v696 = vand.u32 2147483647, %v64
    %vm697 = vcmp.le.f32.partialorder %v696, 0.7853982
    %vm698 = vcmp.lt.s32.totalorder %v64, 0
    %v699 = vand.u32 %v64, 2139095040
    %v700 = vshrl.u32 %v699, 23
    %v701 = vsub.s32 %v700, 127
    %v702 = vand.u32 2147483647, %v64
    %v703 = vand.u32 %v702, 8388607
    %v704 = vor.u32 %v703, 8388608
    %v705 = vsub.s32 0, %v704
    %v706 = vadd.s32 %v701, 1
    %vm707 = vcmp.gt.s32.totalorder %v706, 0
    %v708 = vsel %vm707, %v706, 0
    %v709 = vshrl.u32 %v708, 5
    %v710 = vand.u32 %v708, 31
    %v711 = vsub.s32 32, %v710
    %v712 = vshrl.u32 683565275, %v711
    %v713 = vshll.u32 683565275, %v710
    %v714 = vshrl.u32 2475754826, %v711
    %v715 = vor.u32 %v713, %v714
    %v716 = vshll.u32 2475754826, %v710
    %v717 = vshrl.u32 2131351028, %v711
    %v718 = vor.u32 %v716, %v717
    %v719 = vshll.u32 2131351028, %v710
    %v720 = vshrl.u32 2102212464, %v711
    %v721 = vor.u32 %v719, %v720
    %v722 = vshll.u32 2102212464, %v710
    %v723 = vshrl.u32 920167782, %v711
    %v724 = vor.u32 %v722, %v723
    %v725 = vshll.u32 920167782, %v710
    %v726 = vshrl.u32 1326507024, %v711
    %v727 = vor.u32 %v725, %v726
    %vm728 = vcmp.lt.s32.totalorder %v709, 1
    %vm729 = vcmp.lt.s32.totalorder %v709, 2
    %vm730 = vcmp.lt.s32.totalorder %v709, 3
    %vm731 = vcmp.lt.s32.totalorder %v709, 4
    %v732 = vsel %vm728, %v712, %v715
    %v733 = vsel %vm731, %v721, 2102212464
    %v734 = vsel %vm730, %v718, %v733
    %v735 = vsel %vm729, %v732, %v734
    %v736 = vsel %vm728, %v715, %v718
    %v737 = vsel %vm731, %v724, 920167782
    %v738 = vsel %vm730, %v721, %v737
    %v739 = vsel %vm729, %v736, %v738
    %v740 = vsel %vm728, %v718, %v721
    %v741 = vsel %vm731, %v727, 1326507024
    %v742 = vsel %vm730, %v724, %v741
    %v743 = vsel %vm729, %v740, %v742
    %v744 = vshll.u32 %v704, 8
    %v745 = vand.u32 %v744, 65535
    %v746 = vshrl.u32 %v744, 16
    %v747 = vand.u32 %v743, 65535
    %v748 = vshrl.u32 %v743, 16
    %v749 = vmul.u32 %v745, %v747
    %v750 = vmul.u32 %v745, %v748
    %v751 = vmul.u32 %v746, %v747
    %v752 = vmul.u32 %v746, %v748
    %v753 = vshll.u32 %v750, 16
    %v754 = vshrl.u32 %v750, 16
    %v755 = vshll.u32 %v751, 16
    %v756 = vshrl.u32 %v751, 16
    %vm757 = vc.u32 %v749, %v753
    %v758 = vsel %vm757, 1, 0
    %v759 = vadd.s32 %v749, %v753
    %v760 = vadd.s32 %v752, %v758
    %vm761 = vc.u32 %v759, %v755
    %v762 = vsel %vm761, 1, 0
    %v763 = vadd.s32 %v759, %v755
    %v764 = vadd.s32 %v760, %v762
    %v765 = vadd.s32 %v764, %v754
    %v766 = vadd.s32 %v765, %v756
    %v767 = vand.u32 %v744, 65535
    %v768 = vshrl.u32 %v744, 16
    %v769 = vand.u32 %v739, 65535
    %v770 = vshrl.u32 %v739, 16
    %v771 = vmul.u32 %v767, %v769
    %v772 = vmul.u32 %v767, %v770
    %v773 = vmul.u32 %v768, %v769
    %v774 = vmul.u32 %v768, %v770
    %v775 = vshll.u32 %v772, 16
    %v776 = vshrl.u32 %v772, 16
    %v777 = vshll.u32 %v773, 16
    %v778 = vshrl.u32 %v773, 16
    %vm779 = vc.u32 %v771, %v775
    %v780 = vsel %vm779, 1, 0
    %v781 = vadd.s32 %v771, %v775
    %v782 = vadd.s32 %v774, %v780
    %vm783 = vc.u32 %v781, %v777
    %v784 = vsel %vm783, 1, 0
    %v785 = vadd.s32 %v781, %v777
    %v786 = vadd.s32 %v782, %v784
    %v787 = vadd.s32 %v786, %v776
    %v788 = vadd.s32 %v787, %v778
    %v789 = vmul.u32 %v744, %v735
    %v790 = vadd.s32 %v766, %v785
    %vm791 = vc.u32 %v766, %v785
    %v792 = vadd.s32 %v788, 1
    %v793 = vsel %vm791, %v792, %v788
    %v794 = vadd.s32 %v789, %v793
    %v795 = vadd.s32 %v794, 536870912
    %v796 = vshrl.u32 %v795, 30
    %v797 = vshll.u32 %v796, 30
    %v798 = vsub.s32 %v794, %v797
    %vm799 = vcmp.lt.s32.totalorder %v798, 0
    %v800 = vsub.s32 0, %v798
    %v801 = vsel %vm799, %v800, %v798
    %v802 = vclz %v801
    %v803 = vsub.s32 %v802, 2
    %vm804 = vcmp.gt.s32.totalorder 0, %v803
    %v805 = vsel %vm804, 0, %v803
    %v806 = vsub.s32 32, %v805
    %v807 = vshll.u32 %v798, %v805
    %v808 = vshrl.u32 %v790, %v806
    %v809 = vor.u32 %v807, %v808
    %v810 = vsub.s32 4294967266, %v805
    %v811 = vadd.s32 %v810, 127
    %v812 = vshll.u32 %v811, 23
    %v813 = vor.u32 4788187, %v812
    %v814 = vand.u32 2147483647, %v813
    %v816 = vcvt.s32.f32 %v809
    %v817 = vmul.f32 %v816, %v814
    %v818 = vxor.u32 %v817, 2147483648
    %v819 = vsel %vm698, %v818, %v817
    %v820 = vsub.s32 4, %v796
    %v821 = vsel %vm698, %v820, %v796
    %v822 = vsel %vm697, %v64, %v819
    %v823 = vsel %vm697, 0, %v821
    %v824 = vmul.f32 %v822, %v822
    %v825 = vmul.f32 %v824, -0.001358992
    %v826 = vadd.f32 %v825, 0.041655596
    %v827 = vmul.f32 %v824, %v826
    %v828 = vadd.f32 %v827, -0.4999988
    %v829 = vmul.f32 %v824, %v828
    %v830 = vadd.f32 1.0, %v829
    %v831 = vmul.f32 %v822, %v822
    %v832 = vmul.f32 %v831, -0.00019511016
    %v833 = vadd.f32 %v832, 0.008332121
    %v834 = vmul.f32 %v831, %v833
    %v835 = vadd.f32 %v834, -0.16666654
    %v836 = vmul.f32 %v831, %v835
    %v837 = vadd.f32 %v836, 1.0
    %v838 = vmul.f32 %v837, %v822
    %vm839 = vweird.f32 %v64
    %v840 = vadd.s32 %v823, 3
    %v841 = vand.u32 %v840, 3
    %vm842 = vcmp.lt.s32.totalorder %v841, 2
    %vm843 = vcmp.eq.s32.totalorder %v841, 0
    %v844 = vxor.u32 %v838, 2147483648
    %v845 = vsel %vm843, %v830, %v844
    %vm846 = vcmp.eq.s32.totalorder %v841, 2
    %v847 = vxor.u32 %v830, 2147483648
    %v848 = vsel %vm846, %v847, %v838
    %v849 = vsel %vm842, %v845, %v848
    %v850 = vsel %vm839, nan, %v849
    %v851 = vand.u32 2147483647, %v65
    %vm852 = vcmp.le.f32.partialorder %v851, 0.7853982
    %vm853 = vcmp.lt.s32.totalorder %v65, 0
    %v854 = vand.u32 %v65, 2139095040
    %v855 = vshrl.u32 %v854, 23
    %v856 = vsub.s32 %v855, 127
    %v857 = vand.u32 2147483647, %v65
    %v858 = vand.u32 %v857, 8388607
    %v859 = vor.u32 %v858, 8388608
    %v860 = vsub.s32 0, %v859
    %v861 = vadd.s32 %v856, 1
    %vm862 = vcmp.gt.s32.totalorder %v861, 0
    %v863 = vsel %vm862, %v861, 0
    %v864 = vshrl.u32 %v863, 5
    %v865 = vand.u32 %v863, 31
    %v866 = vsub.s32 32, %v865
    %v867 = vshrl.u32 683565275, %v866
    %v868 = vshll.u32 683565275, %v865
    %v869 = vshrl.u32 2475754826, %v866
    %v870 = vor.u32 %v868, %v869
    %v871 = vshll.u32 2475754826, %v865
    %v872 = vshrl.u32 2131351028, %v866
    %v873 = vor.u32 %v871, %v872
    %v874 = vshll.u32 2131351028, %v865
    %v875 = vshrl.u32 2102212464, %v866
    %v876 = vor.u32 %v874, %v875
    %v877 = vshll.u32 2102212464, %v865
    %v878 = vshrl.u32 920167782, %v866
    %v879 = vor.u32 %v877, %v878
    %v880 = vshll.u32 920167782, %v865
    %v881 = vshrl.u32 1326507024, %v866
    %v882 = vor.u32 %v880, %v881
    %vm883 = vcmp.lt.s32.totalorder %v864, 1
    %vm884 = vcmp.lt.s32.totalorder %v864, 2
    %vm885 = vcmp.lt.s32.totalorder %v864, 3
    %vm886 = vcmp.lt.s32.totalorder %v864, 4
    %v887 = vsel %vm883, %v867, %v870
    %v888 = vsel %vm886, %v876, 2102212464
    %v889 = vsel %vm885, %v873, %v888
    %v890 = vsel %vm884, %v887, %v889
    %v891 = vsel %vm883, %v870, %v873
    %v892 = vsel %vm886, %v879, 920167782
    %v893 = vsel %vm885, %v876, %v892
    %v894 = vsel %vm884, %v891, %v893
    %v895 = vsel %vm883, %v873, %v876
    %v896 = vsel %vm886, %v882, 1326507024
    %v897 = vsel %vm885, %v879, %v896
    %v898 = vsel %vm884, %v895, %v897
    %v899 = vshll.u32 %v859, 8
    %v900 = vand.u32 %v899, 65535
    %v901 = vshrl.u32 %v899, 16
    %v902 = vand.u32 %v898, 65535
    %v903 = vshrl.u32 %v898, 16
    %v904 = vmul.u32 %v900, %v902
    %v905 = vmul.u32 %v900, %v903
    %v906 = vmul.u32 %v901, %v902
    %v907 = vmul.u32 %v901, %v903
    %v908 = vshll.u32 %v905, 16
    %v909 = vshrl.u32 %v905, 16
    %v910 = vshll.u32 %v906, 16
    %v911 = vshrl.u32 %v906, 16
    %vm912 = vc.u32 %v904, %v908
    %v913 = vsel %vm912, 1, 0
    %v914 = vadd.s32 %v904, %v908
    %v915 = vadd.s32 %v907, %v913
    %vm916 = vc.u32 %v914, %v910
    %v917 = vsel %vm916, 1, 0
    %v918 = vadd.s32 %v914, %v910
    %v919 = vadd.s32 %v915, %v917
    %v920 = vadd.s32 %v919, %v909
    %v921 = vadd.s32 %v920, %v911
    %v922 = vand.u32 %v899, 65535
    %v923 = vshrl.u32 %v899, 16
    %v924 = vand.u32 %v894, 65535
    %v925 = vshrl.u32 %v894, 16
    %v926 = vmul.u32 %v922, %v924
    %v927 = vmul.u32 %v922, %v925
    %v928 = vmul.u32 %v923, %v924
    %v929 = vmul.u32 %v923, %v925
    %v930 = vshll.u32 %v927, 16
    %v931 = vshrl.u32 %v927, 16
    %v932 = vshll.u32 %v928, 16
    %v933 = vshrl.u32 %v928, 16
    %vm934 = vc.u32 %v926, %v930
    %v935 = vsel %vm934, 1, 0
    %v936 = vadd.s32 %v926, %v930
    %v937 = vadd.s32 %v929, %v935
    %vm938 = vc.u32 %v936, %v932
    %v939 = vsel %vm938, 1, 0
    %v940 = vadd.s32 %v936, %v932
    %v941 = vadd.s32 %v937, %v939
    %v942 = vadd.s32 %v941, %v931
    %v943 = vadd.s32 %v942, %v933
    %v944 = vmul.u32 %v899, %v890
    %v945 = vadd.s32 %v921, %v940
    %vm946 = vc.u32 %v921, %v940
    %v947 = vadd.s32 %v943, 1
    %v948 = vsel %vm946, %v947, %v943
    %v949 = vadd.s32 %v944, %v948
    %v950 = vadd.s32 %v949, 536870912
    %v951 = vshrl.u32 %v950, 30
    %v952 = vshll.u32 %v951, 30
    %v953 = vsub.s32 %v949, %v952
    %vm954 = vcmp.lt.s32.totalorder %v953, 0
    %v955 = vsub.s32 0, %v953
    %v956 = vsel %vm954, %v955, %v953
    %v957 = vclz %v956
    %v958 = vsub.s32 %v957, 2
    %vm959 = vcmp.gt.s32.totalorder 0, %v958
    %v960 = vsel %vm959, 0, %v958
    %v961 = vsub.s32 32, %v960
    %v962 = vshll.u32 %v953, %v960
    %v963 = vshrl.u32 %v945, %v961
    %v964 = vor.u32 %v962, %v963
    %v965 = vsub.s32 4294967266, %v960
    %v966 = vadd.s32 %v965, 127
    %v967 = vshll.u32 %v966, 23
    %v968 = vor.u32 4788187, %v967
    %v969 = vand.u32 2147483647, %v968
    %v971 = vcvt.s32.f32 %v964
    %v972 = vmul.f32 %v971, %v969
    %v973 = vxor.u32 %v972, 2147483648
    %v974 = vsel %vm853, %v973, %v972
    %v975 = vsub.s32 4, %v951
    %v976 = vsel %vm853, %v975, %v951
    %v977 = vsel %vm852, %v65, %v974
    %v978 = vsel %vm852, 0, %v976
    %v979 = vmul.f32 %v977, %v977
    %v980 = vmul.f32 %v979, -0.001358992
    %v981 = vadd.f32 %v980, 0.041655596
    %v982 = vmul.f32 %v979, %v981
    %v983 = vadd.f32 %v982, -0.4999988
    %v984 = vmul.f32 %v979, %v983
    %v985 = vadd.f32 1.0, %v984
    %v986 = vmul.f32 %v977, %v977
    %v987 = vmul.f32 %v986, -0.00019511016
    %v988 = vadd.f32 %v987, 0.008332121
    %v989 = vmul.f32 %v986, %v988
    %v990 = vadd.f32 %v989, -0.16666654
    %v991 = vmul.f32 %v986, %v990
    %v992 = vadd.f32 %v991, 1.0
    %v993 = vmul.f32 %v992, %v977
    %vm994 = vweird.f32 %v65
    %v995 = vadd.s32 %v978, 3
    %v996 = vand.u32 %v995, 3
    %vm997 = vcmp.lt.s32.totalorder %v996, 2
    %vm998 = vcmp.eq.s32.totalorder %v996, 0
    %v999 = vxor.u32 %v993, 2147483648
    %v1000 = vsel %vm998, %v985, %v999
    %vm1001 = vcmp.eq.s32.totalorder %v996, 2
    %v1002 = vxor.u32 %v985, 2147483648
    %v1003 = vsel %vm1001, %v1002, %v993
    %v1004 = vsel %vm997, %v1000, %v1003
    %v1005 = vsel %vm994, nan, %v1004
    %v1006 = vand.u32 2147483647, %v66
    %vm1007 = vcmp.le.f32.partialorder %v1006, 0.7853982
    %vm1008 = vcmp.lt.s32.totalorder %v66, 0
    %v1009 = vand.u32 %v66, 2139095040
    %v1010 = vshrl.u32 %v1009, 23
    %v1011 = vsub.s32 %v1010, 127
    %v1012 = vand.u32 2147483647, %v66
    %v1013 = vand.u32 %v1012, 8388607
    %v1014 = vor.u32 %v1013, 8388608
    %v1015 = vsub.s32 0, %v1014
    %v1016 = vadd.s32 %v1011, 1
    %vm1017 = vcmp.gt.s32.totalorder %v1016, 0
    %v1018 = vsel %vm1017, %v1016, 0
    %v1019 = vshrl.u32 %v1018, 5
    %v1020 = vand.u32 %v1018, 31
    %v1021 = vsub.s32 32, %v1020
    %v1022 = vshrl.u32 683565275, %v1021
    %v1023 = vshll.u32 683565275, %v1020
    %v1024 = vshrl.u32 2475754826, %v1021
    %v1025 = vor.u32 %v1023, %v1024
    %v1026 = vshll.u32 2475754826, %v1020
    %v1027 = vshrl.u32 2131351028, %v1021
    %v1028 = vor.u32 %v1026, %v1027
    %v1029 = vshll.u32 2131351028, %v1020
    %v1030 = vshrl.u32 2102212464, %v1021
    %v1031 = vor.u32 %v1029, %v1030
    %v1032 = vshll.u32 2102212464, %v1020
    %v1033 = vshrl.u32 920167782, %v1021
    %v1034 = vor.u32 %v1032, %v1033
    %v1035 = vshll.u32 920167782, %v1020
    %v1036 = vshrl.u32 1326507024, %v1021
    %v1037 = vor.u32 %v1035, %v1036
    %vm1038 = vcmp.lt.s32.totalorder %v1019, 1
    %vm1039 = vcmp.lt.s32.totalorder %v1019, 2
    %vm1040 = vcmp.lt.s32.totalorder %v1019, 3
    %vm1041 = vcmp.lt.s32.totalorder %v1019, 4
    %v1042 = vsel %vm1038, %v1022, %v1025
    %v1043 = vsel %vm1041, %v1031, 2102212464
    %v1044 = vsel %vm1040, %v1028, %v1043
    %v1045 = vsel %vm1039, %v1042, %v1044
    %v1046 = vsel %vm1038, %v1025, %v1028
    %v1047 = vsel %vm1041, %v1034, 920167782
    %v1048 = vsel %vm1040, %v1031, %v1047
    %v1049 = vsel %vm1039, %v1046, %v1048
    %v1050 = vsel %vm1038, %v1028, %v1031
    %v1051 = vsel %vm1041, %v1037, 1326507024
    %v1052 = vsel %vm1040, %v1034, %v1051
    %v1053 = vsel %vm1039, %v1050, %v1052
    %v1054 = vshll.u32 %v1014, 8
    %v1055 = vand.u32 %v1054, 65535
    %v1056 = vshrl.u32 %v1054, 16
    %v1057 = vand.u32 %v1053, 65535
    %v1058 = vshrl.u32 %v1053, 16
    %v1059 = vmul.u32 %v1055, %v1057
    %v1060 = vmul.u32 %v1055, %v1058
    %v1061 = vmul.u32 %v1056, %v1057
    %v1062 = vmul.u32 %v1056, %v1058
    %v1063 = vshll.u32 %v1060, 16
    %v1064 = vshrl.u32 %v1060, 16
    %v1065 = vshll.u32 %v1061, 16
    %v1066 = vshrl.u32 %v1061, 16
    %vm1067 = vc.u32 %v1059, %v1063
    %v1068 = vsel %vm1067, 1, 0
    %v1069 = vadd.s32 %v1059, %v1063
    %v1070 = vadd.s32 %v1062, %v1068
    %vm1071 = vc.u32 %v1069, %v1065
    %v1072 = vsel %vm1071, 1, 0
    %v1073 = vadd.s32 %v1069, %v1065
    %v1074 = vadd.s32 %v1070, %v1072
    %v1075 = vadd.s32 %v1074, %v1064
    %v1076 = vadd.s32 %v1075, %v1066
    %v1077 = vand.u32 %v1054, 65535
    %v1078 = vshrl.u32 %v1054, 16
    %v1079 = vand.u32 %v1049, 65535
    %v1080 = vshrl.u32 %v1049, 16
    %v1081 = vmul.u32 %v1077, %v1079
    %v1082 = vmul.u32 %v1077, %v1080
    %v1083 = vmul.u32 %v1078, %v1079
    %v1084 = vmul.u32 %v1078, %v1080
    %v1085 = vshll.u32 %v1082, 16
    %v1086 = vshrl.u32 %v1082, 16
    %v1087 = vshll.u32 %v1083, 16
    %v1088 = vshrl.u32 %v1083, 16
    %vm1089 = vc.u32 %v1081, %v1085
    %v1090 = vsel %vm1089, 1, 0
    %v1091 = vadd.s32 %v1081, %v1085
    %v1092 = vadd.s32 %v1084, %v1090
    %vm1093 = vc.u32 %v1091, %v1087
    %v1094 = vsel %vm1093, 1, 0
    %v1095 = vadd.s32 %v1091, %v1087
    %v1096 = vadd.s32 %v1092, %v1094
    %v1097 = vadd.s32 %v1096, %v1086
    %v1098 = vadd.s32 %v1097, %v1088
    %v1099 = vmul.u32 %v1054, %v1045
    %v1100 = vadd.s32 %v1076, %v1095
    %vm1101 = vc.u32 %v1076, %v1095
    %v1102 = vadd.s32 %v1098, 1
    %v1103 = vsel %vm1101, %v1102, %v1098
    %v1104 = vadd.s32 %v1099, %v1103
    %v1105 = vadd.s32 %v1104, 536870912
    %v1106 = vshrl.u32 %v1105, 30
    %v1107 = vshll.u32 %v1106, 30
    %v1108 = vsub.s32 %v1104, %v1107
    %vm1109 = vcmp.lt.s32.totalorder %v1108, 0
    %v1110 = vsub.s32 0, %v1108
    %v1111 = vsel %vm1109, %v1110, %v1108
    %v1112 = vclz %v1111
    %v1113 = vsub.s32 %v1112, 2
    %vm1114 = vcmp.gt.s32.totalorder 0, %v1113
    %v1115 = vsel %vm1114, 0, %v1113
    %v1116 = vsub.s32 32, %v1115
    %v1117 = vshll.u32 %v1108, %v1115
    %v1118 = vshrl.u32 %v1100, %v1116
    %v1119 = vor.u32 %v1117, %v1118
    %v1120 = vsub.s32 4294967266, %v1115
    %v1121 = vadd.s32 %v1120, 127
    %v1122 = vshll.u32 %v1121, 23
    %v1123 = vor.u32 4788187, %v1122
    %v1124 = vand.u32 2147483647, %v1123
    %v1126 = vcvt.s32.f32 %v1119
    %v1127 = vmul.f32 %v1126, %v1124
    %v1128 = vxor.u32 %v1127, 2147483648
    %v1129 = vsel %vm1008, %v1128, %v1127
    %v1130 = vsub.s32 4, %v1106
    %v1131 = vsel %vm1008, %v1130, %v1106
    %v1132 = vsel %vm1007, %v66, %v1129
    %v1133 = vsel %vm1007, 0, %v1131
    %v1134 = vmul.f32 %v1132, %v1132
    %v1135 = vmul.f32 %v1134, -0.001358992
    %v1136 = vadd.f32 %v1135, 0.041655596
    %v1137 = vmul.f32 %v1134, %v1136
    %v1138 = vadd.f32 %v1137, -0.4999988
    %v1139 = vmul.f32 %v1134, %v1138
    %v1140 = vadd.f32 1.0, %v1139
    %v1141 = vmul.f32 %v1132, %v1132
    %v1142 = vmul.f32 %v1141, -0.00019511016
    %v1143 = vadd.f32 %v1142, 0.008332121
    %v1144 = vmul.f32 %v1141, %v1143
    %v1145 = vadd.f32 %v1144, -0.16666654
    %v1146 = vmul.f32 %v1141, %v1145
    %v1147 = vadd.f32 %v1146, 1.0
    %v1148 = vmul.f32 %v1147, %v1132
    %vm1149 = vweird.f32 %v66
    %v1150 = vadd.s32 %v1133, 3
    %v1151 = vand.u32 %v1150, 3
    %vm1152 = vcmp.lt.s32.totalorder %v1151, 2
    %vm1153 = vcmp.eq.s32.totalorder %v1151, 0
    %v1154 = vxor.u32 %v1148, 2147483648
    %v1155 = vsel %vm1153, %v1140, %v1154
    %vm1156 = vcmp.eq.s32.totalorder %v1151, 2
    %v1157 = vxor.u32 %v1140, 2147483648
    %v1158 = vsel %vm1156, %v1157, %v1148
    %v1159 = vsel %vm1152, %v1155, %v1158
    %v1160 = vsel %vm1149, nan, %v1159
    %v1161 = vand.u32 2147483647, %v67
    %vm1162 = vcmp.le.f32.partialorder %v1161, 0.7853982
    %vm1163 = vcmp.lt.s32.totalorder %v67, 0
    %v1164 = vand.u32 %v67, 2139095040
    %v1165 = vshrl.u32 %v1164, 23
    %v1166 = vsub.s32 %v1165, 127
    %v1167 = vand.u32 2147483647, %v67
    %v1168 = vand.u32 %v1167, 8388607
    %v1169 = vor.u32 %v1168, 8388608
    %v1170 = vsub.s32 0, %v1169
    %v1171 = vadd.s32 %v1166, 1
    %vm1172 = vcmp.gt.s32.totalorder %v1171, 0
    %v1173 = vsel %vm1172, %v1171, 0
    %v1174 = vshrl.u32 %v1173, 5
    %v1175 = vand.u32 %v1173, 31
    %v1176 = vsub.s32 32, %v1175
    %v1177 = vshrl.u32 683565275, %v1176
    %v1178 = vshll.u32 683565275, %v1175
    %v1179 = vshrl.u32 2475754826, %v1176
    %v1180 = vor.u32 %v1178, %v1179
    %v1181 = vshll.u32 2475754826, %v1175
    %v1182 = vshrl.u32 2131351028, %v1176
    %v1183 = vor.u32 %v1181, %v1182
    %v1184 = vshll.u32 2131351028, %v1175
    %v1185 = vshrl.u32 2102212464, %v1176
    %v1186 = vor.u32 %v1184, %v1185
    %v1187 = vshll.u32 2102212464, %v1175
    %v1188 = vshrl.u32 920167782, %v1176
    %v1189 = vor.u32 %v1187, %v1188
    %v1190 = vshll.u32 920167782, %v1175
    %v1191 = vshrl.u32 1326507024, %v1176
    %v1192 = vor.u32 %v1190, %v1191
    %vm1193 = vcmp.lt.s32.totalorder %v1174, 1
    %vm1194 = vcmp.lt.s32.totalorder %v1174, 2
    %vm1195 = vcmp.lt.s32.totalorder %v1174, 3
    %vm1196 = vcmp.lt.s32.totalorder %v1174, 4
    %v1197 = vsel %vm1193, %v1177, %v1180
    %v1198 = vsel %vm1196, %v1186, 2102212464
    %v1199 = vsel %vm1195, %v1183, %v1198
    %v1200 = vsel %vm1194, %v1197, %v1199
    %v1201 = vsel %vm1193, %v1180, %v1183
    %v1202 = vsel %vm1196, %v1189, 920167782
    %v1203 = vsel %vm1195, %v1186, %v1202
    %v1204 = vsel %vm1194, %v1201, %v1203
    %v1205 = vsel %vm1193, %v1183, %v1186
    %v1206 = vsel %vm1196, %v1192, 1326507024
    %v1207 = vsel %vm1195, %v1189, %v1206
    %v1208 = vsel %vm1194, %v1205, %v1207
    %v1209 = vshll.u32 %v1169, 8
    %v1210 = vand.u32 %v1209, 65535
    %v1211 = vshrl.u32 %v1209, 16
    %v1212 = vand.u32 %v1208, 65535
    %v1213 = vshrl.u32 %v1208, 16
    %v1214 = vmul.u32 %v1210, %v1212
    %v1215 = vmul.u32 %v1210, %v1213
    %v1216 = vmul.u32 %v1211, %v1212
    %v1217 = vmul.u32 %v1211, %v1213
    %v1218 = vshll.u32 %v1215, 16
    %v1219 = vshrl.u32 %v1215, 16
    %v1220 = vshll.u32 %v1216, 16
    %v1221 = vshrl.u32 %v1216, 16
    %vm1222 = vc.u32 %v1214, %v1218
    %v1223 = vsel %vm1222, 1, 0
    %v1224 = vadd.s32 %v1214, %v1218
    %v1225 = vadd.s32 %v1217, %v1223
    %vm1226 = vc.u32 %v1224, %v1220
    %v1227 = vsel %vm1226, 1, 0
    %v1228 = vadd.s32 %v1224, %v1220
    %v1229 = vadd.s32 %v1225, %v1227
    %v1230 = vadd.s32 %v1229, %v1219
    %v1231 = vadd.s32 %v1230, %v1221
    %v1232 = vand.u32 %v1209, 65535
    %v1233 = vshrl.u32 %v1209, 16
    %v1234 = vand.u32 %v1204, 65535
    %v1235 = vshrl.u32 %v1204, 16
    %v1236 = vmul.u32 %v1232, %v1234
    %v1237 = vmul.u32 %v1232, %v1235
    %v1238 = vmul.u32 %v1233, %v1234
    %v1239 = vmul.u32 %v1233, %v1235
    %v1240 = vshll.u32 %v1237, 16
    %v1241 = vshrl.u32 %v1237, 16
    %v1242 = vshll.u32 %v1238, 16
    %v1243 = vshrl.u32 %v1238, 16
    %vm1244 = vc.u32 %v1236, %v1240
    %v1245 = vsel %vm1244, 1, 0
    %v1246 = vadd.s32 %v1236, %v1240
    %v1247 = vadd.s32 %v1239, %v1245
    %vm1248 = vc.u32 %v1246, %v1242
    %v1249 = vsel %vm1248, 1, 0
    %v1250 = vadd.s32 %v1246, %v1242
    %v1251 = vadd.s32 %v1247, %v1249
    %v1252 = vadd.s32 %v1251, %v1241
    %v1253 = vadd.s32 %v1252, %v1243
    %v1254 = vmul.u32 %v1209, %v1200
    %v1255 = vadd.s32 %v1231, %v1250
    %vm1256 = vc.u32 %v1231, %v1250
    %v1257 = vadd.s32 %v1253, 1
    %v1258 = vsel %vm1256, %v1257, %v1253
    %v1259 = vadd.s32 %v1254, %v1258
    %v1260 = vadd.s32 %v1259, 536870912
    %v1261 = vshrl.u32 %v1260, 30
    %v1262 = vshll.u32 %v1261, 30
    %v1263 = vsub.s32 %v1259, %v1262
    %vm1264 = vcmp.lt.s32.totalorder %v1263, 0
    %v1265 = vsub.s32 0, %v1263
    %v1266 = vsel %vm1264, %v1265, %v1263
    %v1267 = vclz %v1266
    %v1268 = vsub.s32 %v1267, 2
    %vm1269 = vcmp.gt.s32.totalorder 0, %v1268
    %v1270 = vsel %vm1269, 0, %v1268
    %v1271 = vsub.s32 32, %v1270
    %v1272 = vshll.u32 %v1263, %v1270
    %v1273 = vshrl.u32 %v1255, %v1271
    %v1274 = vor.u32 %v1272, %v1273
    %v1275 = vsub.s32 4294967266, %v1270
    %v1276 = vadd.s32 %v1275, 127
    %v1277 = vshll.u32 %v1276, 23
    %v1278 = vor.u32 4788187, %v1277
    %v1279 = vand.u32 2147483647, %v1278
    %v1281 = vcvt.s32.f32 %v1274
    %v1282 = vmul.f32 %v1281, %v1279
    %v1283 = vxor.u32 %v1282, 2147483648
    %v1284 = vsel %vm1163, %v1283, %v1282
    %v1285 = vsub.s32 4, %v1261
    %v1286 = vsel %vm1163, %v1285, %v1261
    %v1287 = vsel %vm1162, %v67, %v1284
    %v1288 = vsel %vm1162, 0, %v1286
    %v1289 = vmul.f32 %v1287, %v1287
    %v1290 = vmul.f32 %v1289, -0.001358992
    %v1291 = vadd.f32 %v1290, 0.041655596
    %v1292 = vmul.f32 %v1289, %v1291
    %v1293 = vadd.f32 %v1292, -0.4999988
    %v1294 = vmul.f32 %v1289, %v1293
    %v1295 = vadd.f32 1.0, %v1294
    %v1296 = vmul.f32 %v1287, %v1287
    %v1297 = vmul.f32 %v1296, -0.00019511016
    %v1298 = vadd.f32 %v1297, 0.008332121
    %v1299 = vmul.f32 %v1296, %v1298
    %v1300 = vadd.f32 %v1299, -0.16666654
    %v1301 = vmul.f32 %v1296, %v1300
    %v1302 = vadd.f32 %v1301, 1.0
    %v1303 = vmul.f32 %v1302, %v1287
    %vm1304 = vweird.f32 %v67
    %v1305 = vadd.s32 %v1288, 3
    %v1306 = vand.u32 %v1305, 3
    %vm1307 = vcmp.lt.s32.totalorder %v1306, 2
    %vm1308 = vcmp.eq.s32.totalorder %v1306, 0
    %v1309 = vxor.u32 %v1303, 2147483648
    %v1310 = vsel %vm1308, %v1295, %v1309
    %vm1311 = vcmp.eq.s32.totalorder %v1306, 2
    %v1312 = vxor.u32 %v1295, 2147483648
    %v1313 = vsel %vm1311, %v1312, %v1303
    %v1314 = vsel %vm1307, %v1310, %v1313
    %v1315 = vsel %vm1304, nan, %v1314
    %v1316 = vand.u32 2147483647, %v68
    %vm1317 = vcmp.le.f32.partialorder %v1316, 0.7853982
    %vm1318 = vcmp.lt.s32.totalorder %v68, 0
    %v1319 = vand.u32 %v68, 2139095040
    %v1320 = vshrl.u32 %v1319, 23
    %v1321 = vsub.s32 %v1320, 127
    %v1322 = vand.u32 2147483647, %v68
    %v1323 = vand.u32 %v1322, 8388607
    %v1324 = vor.u32 %v1323, 8388608
    %v1325 = vsub.s32 0, %v1324
    %v1326 = vadd.s32 %v1321, 1
    %vm1327 = vcmp.gt.s32.totalorder %v1326, 0
    %v1328 = vsel %vm1327, %v1326, 0
    %v1329 = vshrl.u32 %v1328, 5
    %v1330 = vand.u32 %v1328, 31
    %v1331 = vsub.s32 32, %v1330
    %v1332 = vshrl.u32 683565275, %v1331
    %v1333 = vshll.u32 683565275, %v1330
    %v1334 = vshrl.u32 2475754826, %v1331
    %v1335 = vor.u32 %v1333, %v1334
    %v1336 = vshll.u32 2475754826, %v1330
    %v1337 = vshrl.u32 2131351028, %v1331
    %v1338 = vor.u32 %v1336, %v1337
    %v1339 = vshll.u32 2131351028, %v1330
    %v1340 = vshrl.u32 2102212464, %v1331
    %v1341 = vor.u32 %v1339, %v1340
    %v1342 = vshll.u32 2102212464, %v1330
    %v1343 = vshrl.u32 920167782, %v1331
    %v1344 = vor.u32 %v1342, %v1343
    %v1345 = vshll.u32 920167782, %v1330
    %v1346 = vshrl.u32 1326507024, %v1331
    %v1347 = vor.u32 %v1345, %v1346
    %vm1348 = vcmp.lt.s32.totalorder %v1329, 1
    %vm1349 = vcmp.lt.s32.totalorder %v1329, 2
    %vm1350 = vcmp.lt.s32.totalorder %v1329, 3
    %vm1351 = vcmp.lt.s32.totalorder %v1329, 4
    %v1352 = vsel %vm1348, %v1332, %v1335
    %v1353 = vsel %vm1351, %v1341, 2102212464
    %v1354 = vsel %vm1350, %v1338, %v1353
    %v1355 = vsel %vm1349, %v1352, %v1354
    %v1356 = vsel %vm1348, %v1335, %v1338
    %v1357 = vsel %vm1351, %v1344, 920167782
    %v1358 = vsel %vm1350, %v1341, %v1357
    %v1359 = vsel %vm1349, %v1356, %v1358
    %v1360 = vsel %vm1348, %v1338, %v1341
    %v1361 = vsel %vm1351, %v1347, 1326507024
    %v1362 = vsel %vm1350, %v1344, %v1361
    %v1363 = vsel %vm1349, %v1360, %v1362
    %v1364 = vshll.u32 %v1324, 8
    %v1365 = vand.u32 %v1364, 65535
    %v1366 = vshrl.u32 %v1364, 16
    %v1367 = vand.u32 %v1363, 65535
    %v1368 = vshrl.u32 %v1363, 16
    %v1369 = vmul.u32 %v1365, %v1367
    %v1370 = vmul.u32 %v1365, %v1368
    %v1371 = vmul.u32 %v1366, %v1367
    %v1372 = vmul.u32 %v1366, %v1368
    %v1373 = vshll.u32 %v1370, 16
    %v1374 = vshrl.u32 %v1370, 16
    %v1375 = vshll.u32 %v1371, 16
    %v1376 = vshrl.u32 %v1371, 16
    %vm1377 = vc.u32 %v1369, %v1373
    %v1378 = vsel %vm1377, 1, 0
    %v1379 = vadd.s32 %v1369, %v1373
    %v1380 = vadd.s32 %v1372, %v1378
    %vm1381 = vc.u32 %v1379, %v1375
    %v1382 = vsel %vm1381, 1, 0
    %v1383 = vadd.s32 %v1379, %v1375
    %v1384 = vadd.s32 %v1380, %v1382
    %v1385 = vadd.s32 %v1384, %v1374
    %v1386 = vadd.s32 %v1385, %v1376
    %v1387 = vand.u32 %v1364, 65535
    %v1388 = vshrl.u32 %v1364, 16
    %v1389 = vand.u32 %v1359, 65535
    %v1390 = vshrl.u32 %v1359, 16
    %v1391 = vmul.u32 %v1387, %v1389
    %v1392 = vmul.u32 %v1387, %v1390
    %v1393 = vmul.u32 %v1388, %v1389
    %v1394 = vmul.u32 %v1388, %v1390
    %v1395 = vshll.u32 %v1392, 16
    %v1396 = vshrl.u32 %v1392, 16
    %v1397 = vshll.u32 %v1393, 16
    %v1398 = vshrl.u32 %v1393, 16
    %vm1399 = vc.u32 %v1391, %v1395
    %v1400 = vsel %vm1399, 1, 0
    %v1401 = vadd.s32 %v1391, %v1395
    %v1402 = vadd.s32 %v1394, %v1400
    %vm1403 = vc.u32 %v1401, %v1397
    %v1404 = vsel %vm1403, 1, 0
    %v1405 = vadd.s32 %v1401, %v1397
    %v1406 = vadd.s32 %v1402, %v1404
    %v1407 = vadd.s32 %v1406, %v1396
    %v1408 = vadd.s32 %v1407, %v1398
    %v1409 = vmul.u32 %v1364, %v1355
    %v1410 = vadd.s32 %v1386, %v1405
    %vm1411 = vc.u32 %v1386, %v1405
    %v1412 = vadd.s32 %v1408, 1
    %v1413 = vsel %vm1411, %v1412, %v1408
    %v1414 = vadd.s32 %v1409, %v1413
    %v1415 = vadd.s32 %v1414, 536870912
    %v1416 = vshrl.u32 %v1415, 30
    %v1417 = vshll.u32 %v1416, 30
    %v1418 = vsub.s32 %v1414, %v1417
    %vm1419 = vcmp.lt.s32.totalorder %v1418, 0
    %v1420 = vsub.s32 0, %v1418
    %v1421 = vsel %vm1419, %v1420, %v1418
    %v1422 = vclz %v1421
    %v1423 = vsub.s32 %v1422, 2
    %vm1424 = vcmp.gt.s32.totalorder 0, %v1423
    %v1425 = vsel %vm1424, 0, %v1423
    %v1426 = vsub.s32 32, %v1425
    %v1427 = vshll.u32 %v1418, %v1425
    %v1428 = vshrl.u32 %v1410, %v1426
    %v1429 = vor.u32 %v1427, %v1428
    %v1430 = vsub.s32 4294967266, %v1425
    %v1431 = vadd.s32 %v1430, 127
    %v1432 = vshll.u32 %v1431, 23
    %v1433 = vor.u32 4788187, %v1432
    %v1434 = vand.u32 2147483647, %v1433
    %v1436 = vcvt.s32.f32 %v1429
    %v1437 = vmul.f32 %v1436, %v1434
    %v1438 = vxor.u32 %v1437, 2147483648
    %v1439 = vsel %vm1318, %v1438, %v1437
    %v1440 = vsub.s32 4, %v1416
    %v1441 = vsel %vm1318, %v1440, %v1416
    %v1442 = vsel %vm1317, %v68, %v1439
    %v1443 = vsel %vm1317, 0, %v1441
    %v1444 = vmul.f32 %v1442, %v1442
    %v1445 = vmul.f32 %v1444, -0.001358992
    %v1446 = vadd.f32 %v1445, 0.041655596
    %v1447 = vmul.f32 %v1444, %v1446
    %v1448 = vadd.f32 %v1447, -0.4999988
    %v1449 = vmul.f32 %v1444, %v1448
    %v1450 = vadd.f32 1.0, %v1449
    %v1451 = vmul.f32 %v1442, %v1442
    %v1452 = vmul.f32 %v1451, -0.00019511016
    %v1453 = vadd.f32 %v1452, 0.008332121
    %v1454 = vmul.f32 %v1451, %v1453
    %v1455 = vadd.f32 %v1454, -0.16666654
    %v1456 = vmul.f32 %v1451, %v1455
    %v1457 = vadd.f32 %v1456, 1.0
    %v1458 = vmul.f32 %v1457, %v1442
    %vm1459 = vweird.f32 %v68
    %v1460 = vadd.s32 %v1443, 3
    %v1461 = vand.u32 %v1460, 3
    %vm1462 = vcmp.lt.s32.totalorder %v1461, 2
    %vm1463 = vcmp.eq.s32.totalorder %v1461, 0
    %v1464 = vxor.u32 %v1458, 2147483648
    %v1465 = vsel %vm1463, %v1450, %v1464
    %vm1466 = vcmp.eq.s32.totalorder %v1461, 2
    %v1467 = vxor.u32 %v1450, 2147483648
    %v1468 = vsel %vm1466, %v1467, %v1458
    %v1469 = vsel %vm1462, %v1465, %v1468
    %v1470 = vsel %vm1459, nan, %v1469
    %v1471 = vand.u32 2147483647, %v69
    %vm1472 = vcmp.le.f32.partialorder %v1471, 0.7853982
    %vm1473 = vcmp.lt.s32.totalorder %v69, 0
    %v1474 = vand.u32 %v69, 2139095040
    %v1475 = vshrl.u32 %v1474, 23
    %v1476 = vsub.s32 %v1475, 127
    %v1477 = vand.u32 2147483647, %v69
    %v1478 = vand.u32 %v1477, 8388607
    %v1479 = vor.u32 %v1478, 8388608
    %v1480 = vsub.s32 0, %v1479
    %v1481 = vadd.s32 %v1476, 1
    %vm1482 = vcmp.gt.s32.totalorder %v1481, 0
    %v1483 = vsel %vm1482, %v1481, 0
    %v1484 = vshrl.u32 %v1483, 5
    %v1485 = vand.u32 %v1483, 31
    %v1486 = vsub.s32 32, %v1485
    %v1487 = vshrl.u32 683565275, %v1486
    %v1488 = vshll.u32 683565275, %v1485
    %v1489 = vshrl.u32 2475754826, %v1486
    %v1490 = vor.u32 %v1488, %v1489
    %v1491 = vshll.u32 2475754826, %v1485
    %v1492 = vshrl.u32 2131351028, %v1486
    %v1493 = vor.u32 %v1491, %v1492
    %v1494 = vshll.u32 2131351028, %v1485
    %v1495 = vshrl.u32 2102212464, %v1486
    %v1496 = vor.u32 %v1494, %v1495
    %v1497 = vshll.u32 2102212464, %v1485
    %v1498 = vshrl.u32 920167782, %v1486
    %v1499 = vor.u32 %v1497, %v1498
    %v1500 = vshll.u32 920167782, %v1485
    %v1501 = vshrl.u32 1326507024, %v1486
    %v1502 = vor.u32 %v1500, %v1501
    %vm1503 = vcmp.lt.s32.totalorder %v1484, 1
    %vm1504 = vcmp.lt.s32.totalorder %v1484, 2
    %vm1505 = vcmp.lt.s32.totalorder %v1484, 3
    %vm1506 = vcmp.lt.s32.totalorder %v1484, 4
    %v1507 = vsel %vm1503, %v1487, %v1490
    %v1508 = vsel %vm1506, %v1496, 2102212464
    %v1509 = vsel %vm1505, %v1493, %v1508
    %v1510 = vsel %vm1504, %v1507, %v1509
    %v1511 = vsel %vm1503, %v1490, %v1493
    %v1512 = vsel %vm1506, %v1499, 920167782
    %v1513 = vsel %vm1505, %v1496, %v1512
    %v1514 = vsel %vm1504, %v1511, %v1513
    %v1515 = vsel %vm1503, %v1493, %v1496
    %v1516 = vsel %vm1506, %v1502, 1326507024
    %v1517 = vsel %vm1505, %v1499, %v1516
    %v1518 = vsel %vm1504, %v1515, %v1517
    %v1519 = vshll.u32 %v1479, 8
    %v1520 = vand.u32 %v1519, 65535
    %v1521 = vshrl.u32 %v1519, 16
    %v1522 = vand.u32 %v1518, 65535
    %v1523 = vshrl.u32 %v1518, 16
    %v1524 = vmul.u32 %v1520, %v1522
    %v1525 = vmul.u32 %v1520, %v1523
    %v1526 = vmul.u32 %v1521, %v1522
    %v1527 = vmul.u32 %v1521, %v1523
    %v1528 = vshll.u32 %v1525, 16
    %v1529 = vshrl.u32 %v1525, 16
    %v1530 = vshll.u32 %v1526, 16
    %v1531 = vshrl.u32 %v1526, 16
    %vm1532 = vc.u32 %v1524, %v1528
    %v1533 = vsel %vm1532, 1, 0
    %v1534 = vadd.s32 %v1524, %v1528
    %v1535 = vadd.s32 %v1527, %v1533
    %vm1536 = vc.u32 %v1534, %v1530
    %v1537 = vsel %vm1536, 1, 0
    %v1538 = vadd.s32 %v1534, %v1530
    %v1539 = vadd.s32 %v1535, %v1537
    %v1540 = vadd.s32 %v1539, %v1529
    %v1541 = vadd.s32 %v1540, %v1531
    %v1542 = vand.u32 %v1519, 65535
    %v1543 = vshrl.u32 %v1519, 16
    %v1544 = vand.u32 %v1514, 65535
    %v1545 = vshrl.u32 %v1514, 16
    %v1546 = vmul.u32 %v1542, %v1544
    %v1547 = vmul.u32 %v1542, %v1545
    %v1548 = vmul.u32 %v1543, %v1544
    %v1549 = vmul.u32 %v1543, %v1545
    %v1550 = vshll.u32 %v1547, 16
    %v1551 = vshrl.u32 %v1547, 16
    %v1552 = vshll.u32 %v1548, 16
    %v1553 = vshrl.u32 %v1548, 16
    %vm1554 = vc.u32 %v1546, %v1550
    %v1555 = vsel %vm1554, 1, 0
    %v1556 = vadd.s32 %v1546, %v1550
    %v1557 = vadd.s32 %v1549, %v1555
    %vm1558 = vc.u32 %v1556, %v1552
    %v1559 = vsel %vm1558, 1, 0
    %v1560 = vadd.s32 %v1556, %v1552
    %v1561 = vadd.s32 %v1557, %v1559
    %v1562 = vadd.s32 %v1561, %v1551
    %v1563 = vadd.s32 %v1562, %v1553
    %v1564 = vmul.u32 %v1519, %v1510
    %v1565 = vadd.s32 %v1541, %v1560
    %vm1566 = vc.u32 %v1541, %v1560
    %v1567 = vadd.s32 %v1563, 1
    %v1568 = vsel %vm1566, %v1567, %v1563
    %v1569 = vadd.s32 %v1564, %v1568
    %v1570 = vadd.s32 %v1569, 536870912
    %v1571 = vshrl.u32 %v1570, 30
    %v1572 = vshll.u32 %v1571, 30
    %v1573 = vsub.s32 %v1569, %v1572
    %vm1574 = vcmp.lt.s32.totalorder %v1573, 0
    %v1575 = vsub.s32 0, %v1573
    %v1576 = vsel %vm1574, %v1575, %v1573
    %v1577 = vclz %v1576
    %v1578 = vsub.s32 %v1577, 2
    %vm1579 = vcmp.gt.s32.totalorder 0, %v1578
    %v1580 = vsel %vm1579, 0, %v1578
    %v1581 = vsub.s32 32, %v1580
    %v1582 = vshll.u32 %v1573, %v1580
    %v1583 = vshrl.u32 %v1565, %v1581
    %v1584 = vor.u32 %v1582, %v1583
    %v1585 = vsub.s32 4294967266, %v1580
    %v1586 = vadd.s32 %v1585, 127
    %v1587 = vshll.u32 %v1586, 23
    %v1588 = vor.u32 4788187, %v1587
    %v1589 = vand.u32 2147483647, %v1588
    %v1591 = vcvt.s32.f32 %v1584
    %v1592 = vmul.f32 %v1591, %v1589
    %v1593 = vxor.u32 %v1592, 2147483648
    %v1594 = vsel %vm1473, %v1593, %v1592
    %v1595 = vsub.s32 4, %v1571
    %v1596 = vsel %vm1473, %v1595, %v1571
    %v1597 = vsel %vm1472, %v69, %v1594
    %v1598 = vsel %vm1472, 0, %v1596
    %v1599 = vmul.f32 %v1597, %v1597
    %v1600 = vmul.f32 %v1599, -0.001358992
    %v1601 = vadd.f32 %v1600, 0.041655596
    %v1602 = vmul.f32 %v1599, %v1601
    %v1603 = vadd.f32 %v1602, -0.4999988
    %v1604 = vmul.f32 %v1599, %v1603
    %v1605 = vadd.f32 1.0, %v1604
    %v1606 = vmul.f32 %v1597, %v1597
    %v1607 = vmul.f32 %v1606, -0.00019511016
    %v1608 = vadd.f32 %v1607, 0.008332121
    %v1609 = vmul.f32 %v1606, %v1608
    %v1610 = vadd.f32 %v1609, -0.16666654
    %v1611 = vmul.f32 %v1606, %v1610
    %v1612 = vadd.f32 %v1611, 1.0
    %v1613 = vmul.f32 %v1612, %v1597
    %vm1614 = vweird.f32 %v69
    %v1615 = vadd.s32 %v1598, 3
    %v1616 = vand.u32 %v1615, 3
    %vm1617 = vcmp.lt.s32.totalorder %v1616, 2
    %vm1618 = vcmp.eq.s32.totalorder %v1616, 0
    %v1619 = vxor.u32 %v1613, 2147483648
    %v1620 = vsel %vm1618, %v1605, %v1619
    %vm1621 = vcmp.eq.s32.totalorder %v1616, 2
    %v1622 = vxor.u32 %v1605, 2147483648
    %v1623 = vsel %vm1621, %v1622, %v1613
    %v1624 = vsel %vm1617, %v1620, %v1623
    %v1625 = vsel %vm1614, nan, %v1624
    %v1626 = vand.u32 2147483647, %v70
    %vm1627 = vcmp.le.f32.partialorder %v1626, 0.7853982
    %vm1628 = vcmp.lt.s32.totalorder %v70, 0
    %v1629 = vand.u32 %v70, 2139095040
    %v1630 = vshrl.u32 %v1629, 23
    %v1631 = vsub.s32 %v1630, 127
    %v1632 = vand.u32 2147483647, %v70
    %v1633 = vand.u32 %v1632, 8388607
    %v1634 = vor.u32 %v1633, 8388608
    %v1635 = vsub.s32 0, %v1634
    %v1636 = vadd.s32 %v1631, 1
    %vm1637 = vcmp.gt.s32.totalorder %v1636, 0
    %v1638 = vsel %vm1637, %v1636, 0
    %v1639 = vshrl.u32 %v1638, 5
    %v1640 = vand.u32 %v1638, 31
    %v1641 = vsub.s32 32, %v1640
    %v1642 = vshrl.u32 683565275, %v1641
    %v1643 = vshll.u32 683565275, %v1640
    %v1644 = vshrl.u32 2475754826, %v1641
    %v1645 = vor.u32 %v1643, %v1644
    %v1646 = vshll.u32 2475754826, %v1640
    %v1647 = vshrl.u32 2131351028, %v1641
    %v1648 = vor.u32 %v1646, %v1647
    %v1649 = vshll.u32 2131351028, %v1640
    %v1650 = vshrl.u32 2102212464, %v1641
    %v1651 = vor.u32 %v1649, %v1650
    %v1652 = vshll.u32 2102212464, %v1640
    %v1653 = vshrl.u32 920167782, %v1641
    %v1654 = vor.u32 %v1652, %v1653
    %v1655 = vshll.u32 920167782, %v1640
    %v1656 = vshrl.u32 1326507024, %v1641
    %v1657 = vor.u32 %v1655, %v1656
    %vm1658 = vcmp.lt.s32.totalorder %v1639, 1
    %vm1659 = vcmp.lt.s32.totalorder %v1639, 2
    %vm1660 = vcmp.lt.s32.totalorder %v1639, 3
    %vm1661 = vcmp.lt.s32.totalorder %v1639, 4
    %v1662 = vsel %vm1658, %v1642, %v1645
    %v1663 = vsel %vm1661, %v1651, 2102212464
    %v1664 = vsel %vm1660, %v1648, %v1663
    %v1665 = vsel %vm1659, %v1662, %v1664
    %v1666 = vsel %vm1658, %v1645, %v1648
    %v1667 = vsel %vm1661, %v1654, 920167782
    %v1668 = vsel %vm1660, %v1651, %v1667
    %v1669 = vsel %vm1659, %v1666, %v1668
    %v1670 = vsel %vm1658, %v1648, %v1651
    %v1671 = vsel %vm1661, %v1657, 1326507024
    %v1672 = vsel %vm1660, %v1654, %v1671
    %v1673 = vsel %vm1659, %v1670, %v1672
    %v1674 = vshll.u32 %v1634, 8
    %v1675 = vand.u32 %v1674, 65535
    %v1676 = vshrl.u32 %v1674, 16
    %v1677 = vand.u32 %v1673, 65535
    %v1678 = vshrl.u32 %v1673, 16
    %v1679 = vmul.u32 %v1675, %v1677
    %v1680 = vmul.u32 %v1675, %v1678
    %v1681 = vmul.u32 %v1676, %v1677
    %v1682 = vmul.u32 %v1676, %v1678
    %v1683 = vshll.u32 %v1680, 16
    %v1684 = vshrl.u32 %v1680, 16
    %v1685 = vshll.u32 %v1681, 16
    %v1686 = vshrl.u32 %v1681, 16
    %vm1687 = vc.u32 %v1679, %v1683
    %v1688 = vsel %vm1687, 1, 0
    %v1689 = vadd.s32 %v1679, %v1683
    %v1690 = vadd.s32 %v1682, %v1688
    %vm1691 = vc.u32 %v1689, %v1685
    %v1692 = vsel %vm1691, 1, 0
    %v1693 = vadd.s32 %v1689, %v1685
    %v1694 = vadd.s32 %v1690, %v1692
    %v1695 = vadd.s32 %v1694, %v1684
    %v1696 = vadd.s32 %v1695, %v1686
    %v1697 = vand.u32 %v1674, 65535
    %v1698 = vshrl.u32 %v1674, 16
    %v1699 = vand.u32 %v1669, 65535
    %v1700 = vshrl.u32 %v1669, 16
    %v1701 = vmul.u32 %v1697, %v1699
    %v1702 = vmul.u32 %v1697, %v1700
    %v1703 = vmul.u32 %v1698, %v1699
    %v1704 = vmul.u32 %v1698, %v1700
    %v1705 = vshll.u32 %v1702, 16
    %v1706 = vshrl.u32 %v1702, 16
    %v1707 = vshll.u32 %v1703, 16
    %v1708 = vshrl.u32 %v1703, 16
    %vm1709 = vc.u32 %v1701, %v1705
    %v1710 = vsel %vm1709, 1, 0
    %v1711 = vadd.s32 %v1701, %v1705
    %v1712 = vadd.s32 %v1704, %v1710
    %vm1713 = vc.u32 %v1711, %v1707
    %v1714 = vsel %vm1713, 1, 0
    %v1715 = vadd.s32 %v1711, %v1707
    %v1716 = vadd.s32 %v1712, %v1714
    %v1717 = vadd.s32 %v1716, %v1706
    %v1718 = vadd.s32 %v1717, %v1708
    %v1719 = vmul.u32 %v1674, %v1665
    %v1720 = vadd.s32 %v1696, %v1715
    %vm1721 = vc.u32 %v1696, %v1715
    %v1722 = vadd.s32 %v1718, 1
    %v1723 = vsel %vm1721, %v1722, %v1718
    %v1724 = vadd.s32 %v1719, %v1723
    %v1725 = vadd.s32 %v1724, 536870912
    %v1726 = vshrl.u32 %v1725, 30
    %v1727 = vshll.u32 %v1726, 30
    %v1728 = vsub.s32 %v1724, %v1727
    %vm1729 = vcmp.lt.s32.totalorder %v1728, 0
    %v1730 = vsub.s32 0, %v1728
    %v1731 = vsel %vm1729, %v1730, %v1728
    %v1732 = vclz %v1731
    %v1733 = vsub.s32 %v1732, 2
    %vm1734 = vcmp.gt.s32.totalorder 0, %v1733
    %v1735 = vsel %vm1734, 0, %v1733
    %v1736 = vsub.s32 32, %v1735
    %v1737 = vshll.u32 %v1728, %v1735
    %v1738 = vshrl.u32 %v1720, %v1736
    %v1739 = vor.u32 %v1737, %v1738
    %v1740 = vsub.s32 4294967266, %v1735
    %v1741 = vadd.s32 %v1740, 127
    %v1742 = vshll.u32 %v1741, 23
    %v1743 = vor.u32 4788187, %v1742
    %v1744 = vand.u32 2147483647, %v1743
    %v1746 = vcvt.s32.f32 %v1739
    %v1747 = vmul.f32 %v1746, %v1744
    %v1748 = vxor.u32 %v1747, 2147483648
    %v1749 = vsel %vm1628, %v1748, %v1747
    %v1750 = vsub.s32 4, %v1726
    %v1751 = vsel %vm1628, %v1750, %v1726
    %v1752 = vsel %vm1627, %v70, %v1749
    %v1753 = vsel %vm1627, 0, %v1751
    %v1754 = vmul.f32 %v1752, %v1752
    %v1755 = vmul.f32 %v1754, -0.001358992
    %v1756 = vadd.f32 %v1755, 0.041655596
    %v1757 = vmul.f32 %v1754, %v1756
    %v1758 = vadd.f32 %v1757, -0.4999988
    %v1759 = vmul.f32 %v1754, %v1758
    %v1760 = vadd.f32 1.0, %v1759
    %v1761 = vmul.f32 %v1752, %v1752
    %v1762 = vmul.f32 %v1761, -0.00019511016
    %v1763 = vadd.f32 %v1762, 0.008332121
    %v1764 = vmul.f32 %v1761, %v1763
    %v1765 = vadd.f32 %v1764, -0.16666654
    %v1766 = vmul.f32 %v1761, %v1765
    %v1767 = vadd.f32 %v1766, 1.0
    %v1768 = vmul.f32 %v1767, %v1752
    %vm1769 = vweird.f32 %v70
    %v1770 = vadd.s32 %v1753, 3
    %v1771 = vand.u32 %v1770, 3
    %vm1772 = vcmp.lt.s32.totalorder %v1771, 2
    %vm1773 = vcmp.eq.s32.totalorder %v1771, 0
    %v1774 = vxor.u32 %v1768, 2147483648
    %v1775 = vsel %vm1773, %v1760, %v1774
    %vm1776 = vcmp.eq.s32.totalorder %v1771, 2
    %v1777 = vxor.u32 %v1760, 2147483648
    %v1778 = vsel %vm1776, %v1777, %v1768
    %v1779 = vsel %vm1772, %v1775, %v1778
    %v1780 = vsel %vm1769, nan, %v1779
    %v1781 = vand.u32 2147483647, %v71
    %vm1782 = vcmp.le.f32.partialorder %v1781, 0.7853982
    %vm1783 = vcmp.lt.s32.totalorder %v71, 0
    %v1784 = vand.u32 %v71, 2139095040
    %v1785 = vshrl.u32 %v1784, 23
    %v1786 = vsub.s32 %v1785, 127
    %v1787 = vand.u32 2147483647, %v71
    %v1788 = vand.u32 %v1787, 8388607
    %v1789 = vor.u32 %v1788, 8388608
    %v1790 = vsub.s32 0, %v1789
    %v1791 = vadd.s32 %v1786, 1
    %vm1792 = vcmp.gt.s32.totalorder %v1791, 0
    %v1793 = vsel %vm1792, %v1791, 0
    %v1794 = vshrl.u32 %v1793, 5
    %v1795 = vand.u32 %v1793, 31
    %v1796 = vsub.s32 32, %v1795
    %v1797 = vshrl.u32 683565275, %v1796
    %v1798 = vshll.u32 683565275, %v1795
    %v1799 = vshrl.u32 2475754826, %v1796
    %v1800 = vor.u32 %v1798, %v1799
    %v1801 = vshll.u32 2475754826, %v1795
    %v1802 = vshrl.u32 2131351028, %v1796
    %v1803 = vor.u32 %v1801, %v1802
    %v1804 = vshll.u32 2131351028, %v1795
    %v1805 = vshrl.u32 2102212464, %v1796
    %v1806 = vor.u32 %v1804, %v1805
    %v1807 = vshll.u32 2102212464, %v1795
    %v1808 = vshrl.u32 920167782, %v1796
    %v1809 = vor.u32 %v1807, %v1808
    %v1810 = vshll.u32 920167782, %v1795
    %v1811 = vshrl.u32 1326507024, %v1796
    %v1812 = vor.u32 %v1810, %v1811
    %vm1813 = vcmp.lt.s32.totalorder %v1794, 1
    %vm1814 = vcmp.lt.s32.totalorder %v1794, 2
    %vm1815 = vcmp.lt.s32.totalorder %v1794, 3
    %vm1816 = vcmp.lt.s32.totalorder %v1794, 4
    %v1817 = vsel %vm1813, %v1797, %v1800
    %v1818 = vsel %vm1816, %v1806, 2102212464
    %v1819 = vsel %vm1815, %v1803, %v1818
    %v1820 = vsel %vm1814, %v1817, %v1819
    %v1821 = vsel %vm1813, %v1800, %v1803
    %v1822 = vsel %vm1816, %v1809, 920167782
    %v1823 = vsel %vm1815, %v1806, %v1822
    %v1824 = vsel %vm1814, %v1821, %v1823
    %v1825 = vsel %vm1813, %v1803, %v1806
    %v1826 = vsel %vm1816, %v1812, 1326507024
    %v1827 = vsel %vm1815, %v1809, %v1826
    %v1828 = vsel %vm1814, %v1825, %v1827
    %v1829 = vshll.u32 %v1789, 8
    %v1830 = vand.u32 %v1829, 65535
    %v1831 = vshrl.u32 %v1829, 16
    %v1832 = vand.u32 %v1828, 65535
    %v1833 = vshrl.u32 %v1828, 16
    %v1834 = vmul.u32 %v1830, %v1832
    %v1835 = vmul.u32 %v1830, %v1833
    %v1836 = vmul.u32 %v1831, %v1832
    %v1837 = vmul.u32 %v1831, %v1833
    %v1838 = vshll.u32 %v1835, 16
    %v1839 = vshrl.u32 %v1835, 16
    %v1840 = vshll.u32 %v1836, 16
    %v1841 = vshrl.u32 %v1836, 16
    %vm1842 = vc.u32 %v1834, %v1838
    %v1843 = vsel %vm1842, 1, 0
    %v1844 = vadd.s32 %v1834, %v1838
    %v1845 = vadd.s32 %v1837, %v1843
    %vm1846 = vc.u32 %v1844, %v1840
    %v1847 = vsel %vm1846, 1, 0
    %v1848 = vadd.s32 %v1844, %v1840
    %v1849 = vadd.s32 %v1845, %v1847
    %v1850 = vadd.s32 %v1849, %v1839
    %v1851 = vadd.s32 %v1850, %v1841
    %v1852 = vand.u32 %v1829, 65535
    %v1853 = vshrl.u32 %v1829, 16
    %v1854 = vand.u32 %v1824, 65535
    %v1855 = vshrl.u32 %v1824, 16
    %v1856 = vmul.u32 %v1852, %v1854
    %v1857 = vmul.u32 %v1852, %v1855
    %v1858 = vmul.u32 %v1853, %v1854
    %v1859 = vmul.u32 %v1853, %v1855
    %v1860 = vshll.u32 %v1857, 16
    %v1861 = vshrl.u32 %v1857, 16
    %v1862 = vshll.u32 %v1858, 16
    %v1863 = vshrl.u32 %v1858, 16
    %vm1864 = vc.u32 %v1856, %v1860
    %v1865 = vsel %vm1864, 1, 0
    %v1866 = vadd.s32 %v1856, %v1860
    %v1867 = vadd.s32 %v1859, %v1865
    %vm1868 = vc.u32 %v1866, %v1862
    %v1869 = vsel %vm1868, 1, 0
    %v1870 = vadd.s32 %v1866, %v1862
    %v1871 = vadd.s32 %v1867, %v1869
    %v1872 = vadd.s32 %v1871, %v1861
    %v1873 = vadd.s32 %v1872, %v1863
    %v1874 = vmul.u32 %v1829, %v1820
    %v1875 = vadd.s32 %v1851, %v1870
    %vm1876 = vc.u32 %v1851, %v1870
    %v1877 = vadd.s32 %v1873, 1
    %v1878 = vsel %vm1876, %v1877, %v1873
    %v1879 = vadd.s32 %v1874, %v1878
    %v1880 = vadd.s32 %v1879, 536870912
    %v1881 = vshrl.u32 %v1880, 30
    %v1882 = vshll.u32 %v1881, 30
    %v1883 = vsub.s32 %v1879, %v1882
    %vm1884 = vcmp.lt.s32.totalorder %v1883, 0
    %v1885 = vsub.s32 0, %v1883
    %v1886 = vsel %vm1884, %v1885, %v1883
    %v1887 = vclz %v1886
    %v1888 = vsub.s32 %v1887, 2
    %vm1889 = vcmp.gt.s32.totalorder 0, %v1888
    %v1890 = vsel %vm1889, 0, %v1888
    %v1891 = vsub.s32 32, %v1890
    %v1892 = vshll.u32 %v1883, %v1890
    %v1893 = vshrl.u32 %v1875, %v1891
    %v1894 = vor.u32 %v1892, %v1893
    %v1895 = vsub.s32 4294967266, %v1890
    %v1896 = vadd.s32 %v1895, 127
    %v1897 = vshll.u32 %v1896, 23
    %v1898 = vor.u32 4788187, %v1897
    %v1899 = vand.u32 2147483647, %v1898
    %v1901 = vcvt.s32.f32 %v1894
    %v1902 = vmul.f32 %v1901, %v1899
    %v1903 = vxor.u32 %v1902, 2147483648
    %v1904 = vsel %vm1783, %v1903, %v1902
    %v1905 = vsub.s32 4, %v1881
    %v1906 = vsel %vm1783, %v1905, %v1881
    %v1907 = vsel %vm1782, %v71, %v1904
    %v1908 = vsel %vm1782, 0, %v1906
    %v1909 = vmul.f32 %v1907, %v1907
    %v1910 = vmul.f32 %v1909, -0.001358992
    %v1911 = vadd.f32 %v1910, 0.041655596
    %v1912 = vmul.f32 %v1909, %v1911
    %v1913 = vadd.f32 %v1912, -0.4999988
    %v1914 = vmul.f32 %v1909, %v1913
    %v1915 = vadd.f32 1.0, %v1914
    %v1916 = vmul.f32 %v1907, %v1907
    %v1917 = vmul.f32 %v1916, -0.00019511016
    %v1918 = vadd.f32 %v1917, 0.008332121
    %v1919 = vmul.f32 %v1916, %v1918
    %v1920 = vadd.f32 %v1919, -0.16666654
    %v1921 = vmul.f32 %v1916, %v1920
    %v1922 = vadd.f32 %v1921, 1.0
    %v1923 = vmul.f32 %v1922, %v1907
    %vm1924 = vweird.f32 %v71
    %v1925 = vadd.s32 %v1908, 3
    %v1926 = vand.u32 %v1925, 3
    %vm1927 = vcmp.lt.s32.totalorder %v1926, 2
    %vm1928 = vcmp.eq.s32.totalorder %v1926, 0
    %v1929 = vxor.u32 %v1923, 2147483648
    %v1930 = vsel %vm1928, %v1915, %v1929
    %vm1931 = vcmp.eq.s32.totalorder %v1926, 2
    %v1932 = vxor.u32 %v1915, 2147483648
    %v1933 = vsel %vm1931, %v1932, %v1923
    %v1934 = vsel %vm1927, %v1930, %v1933
    %v1935 = vsel %vm1924, nan, %v1934
    %v1936 = vand.u32 2147483647, %v72
    %vm1937 = vcmp.le.f32.partialorder %v1936, 0.7853982
    %vm1938 = vcmp.lt.s32.totalorder %v72, 0
    %v1939 = vand.u32 %v72, 2139095040
    %v1940 = vshrl.u32 %v1939, 23
    %v1941 = vsub.s32 %v1940, 127
    %v1942 = vand.u32 2147483647, %v72
    %v1943 = vand.u32 %v1942, 8388607
    %v1944 = vor.u32 %v1943, 8388608
    %v1945 = vsub.s32 0, %v1944
    %v1946 = vadd.s32 %v1941, 1
    %vm1947 = vcmp.gt.s32.totalorder %v1946, 0
    %v1948 = vsel %vm1947, %v1946, 0
    %v1949 = vshrl.u32 %v1948, 5
    %v1950 = vand.u32 %v1948, 31
    %v1951 = vsub.s32 32, %v1950
    %v1952 = vshrl.u32 683565275, %v1951
    %v1953 = vshll.u32 683565275, %v1950
    %v1954 = vshrl.u32 2475754826, %v1951
    %v1955 = vor.u32 %v1953, %v1954
    %v1956 = vshll.u32 2475754826, %v1950
    %v1957 = vshrl.u32 2131351028, %v1951
    %v1958 = vor.u32 %v1956, %v1957
    %v1959 = vshll.u32 2131351028, %v1950
    %v1960 = vshrl.u32 2102212464, %v1951
    %v1961 = vor.u32 %v1959, %v1960
    %v1962 = vshll.u32 2102212464, %v1950
    %v1963 = vshrl.u32 920167782, %v1951
    %v1964 = vor.u32 %v1962, %v1963
    %v1965 = vshll.u32 920167782, %v1950
    %v1966 = vshrl.u32 1326507024, %v1951
    %v1967 = vor.u32 %v1965, %v1966
    %vm1968 = vcmp.lt.s32.totalorder %v1949, 1
    %vm1969 = vcmp.lt.s32.totalorder %v1949, 2
    %vm1970 = vcmp.lt.s32.totalorder %v1949, 3
    %vm1971 = vcmp.lt.s32.totalorder %v1949, 4
    %v1972 = vsel %vm1968, %v1952, %v1955
    %v1973 = vsel %vm1971, %v1961, 2102212464
    %v1974 = vsel %vm1970, %v1958, %v1973
    %v1975 = vsel %vm1969, %v1972, %v1974
    %v1976 = vsel %vm1968, %v1955, %v1958
    %v1977 = vsel %vm1971, %v1964, 920167782
    %v1978 = vsel %vm1970, %v1961, %v1977
    %v1979 = vsel %vm1969, %v1976, %v1978
    %v1980 = vsel %vm1968, %v1958, %v1961
    %v1981 = vsel %vm1971, %v1967, 1326507024
    %v1982 = vsel %vm1970, %v1964, %v1981
    %v1983 = vsel %vm1969, %v1980, %v1982
    %v1984 = vshll.u32 %v1944, 8
    %v1985 = vand.u32 %v1984, 65535
    %v1986 = vshrl.u32 %v1984, 16
    %v1987 = vand.u32 %v1983, 65535
    %v1988 = vshrl.u32 %v1983, 16
    %v1989 = vmul.u32 %v1985, %v1987
    %v1990 = vmul.u32 %v1985, %v1988
    %v1991 = vmul.u32 %v1986, %v1987
    %v1992 = vmul.u32 %v1986, %v1988
    %v1993 = vshll.u32 %v1990, 16
    %v1994 = vshrl.u32 %v1990, 16
    %v1995 = vshll.u32 %v1991, 16
    %v1996 = vshrl.u32 %v1991, 16
    %vm1997 = vc.u32 %v1989, %v1993
    %v1998 = vsel %vm1997, 1, 0
    %v1999 = vadd.s32 %v1989, %v1993
    %v2000 = vadd.s32 %v1992, %v1998
    %vm2001 = vc.u32 %v1999, %v1995
    %v2002 = vsel %vm2001, 1, 0
    %v2003 = vadd.s32 %v1999, %v1995
    %v2004 = vadd.s32 %v2000, %v2002
    %v2005 = vadd.s32 %v2004, %v1994
    %v2006 = vadd.s32 %v2005, %v1996
    %v2007 = vand.u32 %v1984, 65535
    %v2008 = vshrl.u32 %v1984, 16
    %v2009 = vand.u32 %v1979, 65535
    %v2010 = vshrl.u32 %v1979, 16
    %v2011 = vmul.u32 %v2007, %v2009
    %v2012 = vmul.u32 %v2007, %v2010
    %v2013 = vmul.u32 %v2008, %v2009
    %v2014 = vmul.u32 %v2008, %v2010
    %v2015 = vshll.u32 %v2012, 16
    %v2016 = vshrl.u32 %v2012, 16
    %v2017 = vshll.u32 %v2013, 16
    %v2018 = vshrl.u32 %v2013, 16
    %vm2019 = vc.u32 %v2011, %v2015
    %v2020 = vsel %vm2019, 1, 0
    %v2021 = vadd.s32 %v2011, %v2015
    %v2022 = vadd.s32 %v2014, %v2020
    %vm2023 = vc.u32 %v2021, %v2017
    %v2024 = vsel %vm2023, 1, 0
    %v2025 = vadd.s32 %v2021, %v2017
    %v2026 = vadd.s32 %v2022, %v2024
    %v2027 = vadd.s32 %v2026, %v2016
    %v2028 = vadd.s32 %v2027, %v2018
    %v2029 = vmul.u32 %v1984, %v1975
    %v2030 = vadd.s32 %v2006, %v2025
    %vm2031 = vc.u32 %v2006, %v2025
    %v2032 = vadd.s32 %v2028, 1
    %v2033 = vsel %vm2031, %v2032, %v2028
    %v2034 = vadd.s32 %v2029, %v2033
    %v2035 = vadd.s32 %v2034, 536870912
    %v2036 = vshrl.u32 %v2035, 30
    %v2037 = vshll.u32 %v2036, 30
    %v2038 = vsub.s32 %v2034, %v2037
    %vm2039 = vcmp.lt.s32.totalorder %v2038, 0
    %v2040 = vsub.s32 0, %v2038
    %v2041 = vsel %vm2039, %v2040, %v2038
    %v2042 = vclz %v2041
    %v2043 = vsub.s32 %v2042, 2
    %vm2044 = vcmp.gt.s32.totalorder 0, %v2043
    %v2045 = vsel %vm2044, 0, %v2043
    %v2046 = vsub.s32 32, %v2045
    %v2047 = vshll.u32 %v2038, %v2045
    %v2048 = vshrl.u32 %v2030, %v2046
    %v2049 = vor.u32 %v2047, %v2048
    %v2050 = vsub.s32 4294967266, %v2045
    %v2051 = vadd.s32 %v2050, 127
    %v2052 = vshll.u32 %v2051, 23
    %v2053 = vor.u32 4788187, %v2052
    %v2054 = vand.u32 2147483647, %v2053
    %v2056 = vcvt.s32.f32 %v2049
    %v2057 = vmul.f32 %v2056, %v2054
    %v2058 = vxor.u32 %v2057, 2147483648
    %v2059 = vsel %vm1938, %v2058, %v2057
    %v2060 = vsub.s32 4, %v2036
    %v2061 = vsel %vm1938, %v2060, %v2036
    %v2062 = vsel %vm1937, %v72, %v2059
    %v2063 = vsel %vm1937, 0, %v2061
    %v2064 = vmul.f32 %v2062, %v2062
    %v2065 = vmul.f32 %v2064, -0.001358992
    %v2066 = vadd.f32 %v2065, 0.041655596
    %v2067 = vmul.f32 %v2064, %v2066
    %v2068 = vadd.f32 %v2067, -0.4999988
    %v2069 = vmul.f32 %v2064, %v2068
    %v2070 = vadd.f32 1.0, %v2069
    %v2071 = vmul.f32 %v2062, %v2062
    %v2072 = vmul.f32 %v2071, -0.00019511016
    %v2073 = vadd.f32 %v2072, 0.008332121
    %v2074 = vmul.f32 %v2071, %v2073
    %v2075 = vadd.f32 %v2074, -0.16666654
    %v2076 = vmul.f32 %v2071, %v2075
    %v2077 = vadd.f32 %v2076, 1.0
    %v2078 = vmul.f32 %v2077, %v2062
    %vm2079 = vweird.f32 %v72
    %v2080 = vadd.s32 %v2063, 3
    %v2081 = vand.u32 %v2080, 3
    %vm2082 = vcmp.lt.s32.totalorder %v2081, 2
    %vm2083 = vcmp.eq.s32.totalorder %v2081, 0
    %v2084 = vxor.u32 %v2078, 2147483648
    %v2085 = vsel %vm2083, %v2070, %v2084
    %vm2086 = vcmp.eq.s32.totalorder %v2081, 2
    %v2087 = vxor.u32 %v2070, 2147483648
    %v2088 = vsel %vm2086, %v2087, %v2078
    %v2089 = vsel %vm2082, %v2085, %v2088
    %v2090 = vsel %vm2079, nan, %v2089
    %v2091 = vand.u32 2147483647, %v73
    %vm2092 = vcmp.le.f32.partialorder %v2091, 0.7853982
    %vm2093 = vcmp.lt.s32.totalorder %v73, 0
    %v2094 = vand.u32 %v73, 2139095040
    %v2095 = vshrl.u32 %v2094, 23
    %v2096 = vsub.s32 %v2095, 127
    %v2097 = vand.u32 2147483647, %v73
    %v2098 = vand.u32 %v2097, 8388607
    %v2099 = vor.u32 %v2098, 8388608
    %v2100 = vsub.s32 0, %v2099
    %v2101 = vadd.s32 %v2096, 1
    %vm2102 = vcmp.gt.s32.totalorder %v2101, 0
    %v2103 = vsel %vm2102, %v2101, 0
    %v2104 = vshrl.u32 %v2103, 5
    %v2105 = vand.u32 %v2103, 31
    %v2106 = vsub.s32 32, %v2105
    %v2107 = vshrl.u32 683565275, %v2106
    %v2108 = vshll.u32 683565275, %v2105
    %v2109 = vshrl.u32 2475754826, %v2106
    %v2110 = vor.u32 %v2108, %v2109
    %v2111 = vshll.u32 2475754826, %v2105
    %v2112 = vshrl.u32 2131351028, %v2106
    %v2113 = vor.u32 %v2111, %v2112
    %v2114 = vshll.u32 2131351028, %v2105
    %v2115 = vshrl.u32 2102212464, %v2106
    %v2116 = vor.u32 %v2114, %v2115
    %v2117 = vshll.u32 2102212464, %v2105
    %v2118 = vshrl.u32 920167782, %v2106
    %v2119 = vor.u32 %v2117, %v2118
    %v2120 = vshll.u32 920167782, %v2105
    %v2121 = vshrl.u32 1326507024, %v2106
    %v2122 = vor.u32 %v2120, %v2121
    %vm2123 = vcmp.lt.s32.totalorder %v2104, 1
    %vm2124 = vcmp.lt.s32.totalorder %v2104, 2
    %vm2125 = vcmp.lt.s32.totalorder %v2104, 3
    %vm2126 = vcmp.lt.s32.totalorder %v2104, 4
    %v2127 = vsel %vm2123, %v2107, %v2110
    %v2128 = vsel %vm2126, %v2116, 2102212464
    %v2129 = vsel %vm2125, %v2113, %v2128
    %v2130 = vsel %vm2124, %v2127, %v2129
    %v2131 = vsel %vm2123, %v2110, %v2113
    %v2132 = vsel %vm2126, %v2119, 920167782
    %v2133 = vsel %vm2125, %v2116, %v2132
    %v2134 = vsel %vm2124, %v2131, %v2133
    %v2135 = vsel %vm2123, %v2113, %v2116
    %v2136 = vsel %vm2126, %v2122, 1326507024
    %v2137 = vsel %vm2125, %v2119, %v2136
    %v2138 = vsel %vm2124, %v2135, %v2137
    %v2139 = vshll.u32 %v2099, 8
    %v2140 = vand.u32 %v2139, 65535
    %v2141 = vshrl.u32 %v2139, 16
    %v2142 = vand.u32 %v2138, 65535
    %v2143 = vshrl.u32 %v2138, 16
    %v2144 = vmul.u32 %v2140, %v2142
    %v2145 = vmul.u32 %v2140, %v2143
    %v2146 = vmul.u32 %v2141, %v2142
    %v2147 = vmul.u32 %v2141, %v2143
    %v2148 = vshll.u32 %v2145, 16
    %v2149 = vshrl.u32 %v2145, 16
    %v2150 = vshll.u32 %v2146, 16
    %v2151 = vshrl.u32 %v2146, 16
    %vm2152 = vc.u32 %v2144, %v2148
    %v2153 = vsel %vm2152, 1, 0
    %v2154 = vadd.s32 %v2144, %v2148
    %v2155 = vadd.s32 %v2147, %v2153
    %vm2156 = vc.u32 %v2154, %v2150
    %v2157 = vsel %vm2156, 1, 0
    %v2158 = vadd.s32 %v2154, %v2150
    %v2159 = vadd.s32 %v2155, %v2157
    %v2160 = vadd.s32 %v2159, %v2149
    %v2161 = vadd.s32 %v2160, %v2151
    %v2162 = vand.u32 %v2139, 65535
    %v2163 = vshrl.u32 %v2139, 16
    %v2164 = vand.u32 %v2134, 65535
    %v2165 = vshrl.u32 %v2134, 16
    %v2166 = vmul.u32 %v2162, %v2164
    %v2167 = vmul.u32 %v2162, %v2165
    %v2168 = vmul.u32 %v2163, %v2164
    %v2169 = vmul.u32 %v2163, %v2165
    %v2170 = vshll.u32 %v2167, 16
    %v2171 = vshrl.u32 %v2167, 16
    %v2172 = vshll.u32 %v2168, 16
    %v2173 = vshrl.u32 %v2168, 16
    %vm2174 = vc.u32 %v2166, %v2170
    %v2175 = vsel %vm2174, 1, 0
    %v2176 = vadd.s32 %v2166, %v2170
    %v2177 = vadd.s32 %v2169, %v2175
    %vm2178 = vc.u32 %v2176, %v2172
    %v2179 = vsel %vm2178, 1, 0
    %v2180 = vadd.s32 %v2176, %v2172
    %v2181 = vadd.s32 %v2177, %v2179
    %v2182 = vadd.s32 %v2181, %v2171
    %v2183 = vadd.s32 %v2182, %v2173
    %v2184 = vmul.u32 %v2139, %v2130
    %v2185 = vadd.s32 %v2161, %v2180
    %vm2186 = vc.u32 %v2161, %v2180
    %v2187 = vadd.s32 %v2183, 1
    %v2188 = vsel %vm2186, %v2187, %v2183
    %v2189 = vadd.s32 %v2184, %v2188
    %v2190 = vadd.s32 %v2189, 536870912
    %v2191 = vshrl.u32 %v2190, 30
    %v2192 = vshll.u32 %v2191, 30
    %v2193 = vsub.s32 %v2189, %v2192
    %vm2194 = vcmp.lt.s32.totalorder %v2193, 0
    %v2195 = vsub.s32 0, %v2193
    %v2196 = vsel %vm2194, %v2195, %v2193
    %v2197 = vclz %v2196
    %v2198 = vsub.s32 %v2197, 2
    %vm2199 = vcmp.gt.s32.totalorder 0, %v2198
    %v2200 = vsel %vm2199, 0, %v2198
    %v2201 = vsub.s32 32, %v2200
    %v2202 = vshll.u32 %v2193, %v2200
    %v2203 = vshrl.u32 %v2185, %v2201
    %v2204 = vor.u32 %v2202, %v2203
    %v2205 = vsub.s32 4294967266, %v2200
    %v2206 = vadd.s32 %v2205, 127
    %v2207 = vshll.u32 %v2206, 23
    %v2208 = vor.u32 4788187, %v2207
    %v2209 = vand.u32 2147483647, %v2208
    %v2211 = vcvt.s32.f32 %v2204
    %v2212 = vmul.f32 %v2211, %v2209
    %v2213 = vxor.u32 %v2212, 2147483648
    %v2214 = vsel %vm2093, %v2213, %v2212
    %v2215 = vsub.s32 4, %v2191
    %v2216 = vsel %vm2093, %v2215, %v2191
    %v2217 = vsel %vm2092, %v73, %v2214
    %v2218 = vsel %vm2092, 0, %v2216
    %v2219 = vmul.f32 %v2217, %v2217
    %v2220 = vmul.f32 %v2219, -0.001358992
    %v2221 = vadd.f32 %v2220, 0.041655596
    %v2222 = vmul.f32 %v2219, %v2221
    %v2223 = vadd.f32 %v2222, -0.4999988
    %v2224 = vmul.f32 %v2219, %v2223
    %v2225 = vadd.f32 1.0, %v2224
    %v2226 = vmul.f32 %v2217, %v2217
    %v2227 = vmul.f32 %v2226, -0.00019511016
    %v2228 = vadd.f32 %v2227, 0.008332121
    %v2229 = vmul.f32 %v2226, %v2228
    %v2230 = vadd.f32 %v2229, -0.16666654
    %v2231 = vmul.f32 %v2226, %v2230
    %v2232 = vadd.f32 %v2231, 1.0
    %v2233 = vmul.f32 %v2232, %v2217
    %vm2234 = vweird.f32 %v73
    %v2235 = vadd.s32 %v2218, 3
    %v2236 = vand.u32 %v2235, 3
    %vm2237 = vcmp.lt.s32.totalorder %v2236, 2
    %vm2238 = vcmp.eq.s32.totalorder %v2236, 0
    %v2239 = vxor.u32 %v2233, 2147483648
    %v2240 = vsel %vm2238, %v2225, %v2239
    %vm2241 = vcmp.eq.s32.totalorder %v2236, 2
    %v2242 = vxor.u32 %v2225, 2147483648
    %v2243 = vsel %vm2241, %v2242, %v2233
    %v2244 = vsel %vm2237, %v2240, %v2243
    %v2245 = vsel %vm2234, nan, %v2244
    %v2246 = vand.u32 2147483647, %v74
    %vm2247 = vcmp.le.f32.partialorder %v2246, 0.7853982
    %vm2248 = vcmp.lt.s32.totalorder %v74, 0
    %v2249 = vand.u32 %v74, 2139095040
    %v2250 = vshrl.u32 %v2249, 23
    %v2251 = vsub.s32 %v2250, 127
    %v2252 = vand.u32 2147483647, %v74
    %v2253 = vand.u32 %v2252, 8388607
    %v2254 = vor.u32 %v2253, 8388608
    %v2255 = vsub.s32 0, %v2254
    %v2256 = vadd.s32 %v2251, 1
    %vm2257 = vcmp.gt.s32.totalorder %v2256, 0
    %v2258 = vsel %vm2257, %v2256, 0
    %v2259 = vshrl.u32 %v2258, 5
    %v2260 = vand.u32 %v2258, 31
    %v2261 = vsub.s32 32, %v2260
    %v2262 = vshrl.u32 683565275, %v2261
    %v2263 = vshll.u32 683565275, %v2260
    %v2264 = vshrl.u32 2475754826, %v2261
    %v2265 = vor.u32 %v2263, %v2264
    %v2266 = vshll.u32 2475754826, %v2260
    %v2267 = vshrl.u32 2131351028, %v2261
    %v2268 = vor.u32 %v2266, %v2267
    %v2269 = vshll.u32 2131351028, %v2260
    %v2270 = vshrl.u32 2102212464, %v2261
    %v2271 = vor.u32 %v2269, %v2270
    %v2272 = vshll.u32 2102212464, %v2260
    %v2273 = vshrl.u32 920167782, %v2261
    %v2274 = vor.u32 %v2272, %v2273
    %v2275 = vshll.u32 920167782, %v2260
    %v2276 = vshrl.u32 1326507024, %v2261
    %v2277 = vor.u32 %v2275, %v2276
    %vm2278 = vcmp.lt.s32.totalorder %v2259, 1
    %vm2279 = vcmp.lt.s32.totalorder %v2259, 2
    %vm2280 = vcmp.lt.s32.totalorder %v2259, 3
    %vm2281 = vcmp.lt.s32.totalorder %v2259, 4
    %v2282 = vsel %vm2278, %v2262, %v2265
    %v2283 = vsel %vm2281, %v2271, 2102212464
    %v2284 = vsel %vm2280, %v2268, %v2283
    %v2285 = vsel %vm2279, %v2282, %v2284
    %v2286 = vsel %vm2278, %v2265, %v2268
    %v2287 = vsel %vm2281, %v2274, 920167782
    %v2288 = vsel %vm2280, %v2271, %v2287
    %v2289 = vsel %vm2279, %v2286, %v2288
    %v2290 = vsel %vm2278, %v2268, %v2271
    %v2291 = vsel %vm2281, %v2277, 1326507024
    %v2292 = vsel %vm2280, %v2274, %v2291
    %v2293 = vsel %vm2279, %v2290, %v2292
    %v2294 = vshll.u32 %v2254, 8
    %v2295 = vand.u32 %v2294, 65535
    %v2296 = vshrl.u32 %v2294, 16
    %v2297 = vand.u32 %v2293, 65535
    %v2298 = vshrl.u32 %v2293, 16
    %v2299 = vmul.u32 %v2295, %v2297
    %v2300 = vmul.u32 %v2295, %v2298
    %v2301 = vmul.u32 %v2296, %v2297
    %v2302 = vmul.u32 %v2296, %v2298
    %v2303 = vshll.u32 %v2300, 16
    %v2304 = vshrl.u32 %v2300, 16
    %v2305 = vshll.u32 %v2301, 16
    %v2306 = vshrl.u32 %v2301, 16
    %vm2307 = vc.u32 %v2299, %v2303
    %v2308 = vsel %vm2307, 1, 0
    %v2309 = vadd.s32 %v2299, %v2303
    %v2310 = vadd.s32 %v2302, %v2308
    %vm2311 = vc.u32 %v2309, %v2305
    %v2312 = vsel %vm2311, 1, 0
    %v2313 = vadd.s32 %v2309, %v2305
    %v2314 = vadd.s32 %v2310, %v2312
    %v2315 = vadd.s32 %v2314, %v2304
    %v2316 = vadd.s32 %v2315, %v2306
    %v2317 = vand.u32 %v2294, 65535
    %v2318 = vshrl.u32 %v2294, 16
    %v2319 = vand.u32 %v2289, 65535
    %v2320 = vshrl.u32 %v2289, 16
    %v2321 = vmul.u32 %v2317, %v2319
    %v2322 = vmul.u32 %v2317, %v2320
    %v2323 = vmul.u32 %v2318, %v2319
    %v2324 = vmul.u32 %v2318, %v2320
    %v2325 = vshll.u32 %v2322, 16
    %v2326 = vshrl.u32 %v2322, 16
    %v2327 = vshll.u32 %v2323, 16
    %v2328 = vshrl.u32 %v2323, 16
    %vm2329 = vc.u32 %v2321, %v2325
    %v2330 = vsel %vm2329, 1, 0
    %v2331 = vadd.s32 %v2321, %v2325
    %v2332 = vadd.s32 %v2324, %v2330
    %vm2333 = vc.u32 %v2331, %v2327
    %v2334 = vsel %vm2333, 1, 0
    %v2335 = vadd.s32 %v2331, %v2327
    %v2336 = vadd.s32 %v2332, %v2334
    %v2337 = vadd.s32 %v2336, %v2326
    %v2338 = vadd.s32 %v2337, %v2328
    %v2339 = vmul.u32 %v2294, %v2285
    %v2340 = vadd.s32 %v2316, %v2335
    %vm2341 = vc.u32 %v2316, %v2335
    %v2342 = vadd.s32 %v2338, 1
    %v2343 = vsel %vm2341, %v2342, %v2338
    %v2344 = vadd.s32 %v2339, %v2343
    %v2345 = vadd.s32 %v2344, 536870912
    %v2346 = vshrl.u32 %v2345, 30
    %v2347 = vshll.u32 %v2346, 30
    %v2348 = vsub.s32 %v2344, %v2347
    %vm2349 = vcmp.lt.s32.totalorder %v2348, 0
    %v2350 = vsub.s32 0, %v2348
    %v2351 = vsel %vm2349, %v2350, %v2348
    %v2352 = vclz %v2351
    %v2353 = vsub.s32 %v2352, 2
    %vm2354 = vcmp.gt.s32.totalorder 0, %v2353
    %v2355 = vsel %vm2354, 0, %v2353
    %v2356 = vsub.s32 32, %v2355
    %v2357 = vshll.u32 %v2348, %v2355
    %v2358 = vshrl.u32 %v2340, %v2356
    %v2359 = vor.u32 %v2357, %v2358
    %v2360 = vsub.s32 4294967266, %v2355
    %v2361 = vadd.s32 %v2360, 127
    %v2362 = vshll.u32 %v2361, 23
    %v2363 = vor.u32 4788187, %v2362
    %v2364 = vand.u32 2147483647, %v2363
    %v2366 = vcvt.s32.f32 %v2359
    %v2367 = vmul.f32 %v2366, %v2364
    %v2368 = vxor.u32 %v2367, 2147483648
    %v2369 = vsel %vm2248, %v2368, %v2367
    %v2370 = vsub.s32 4, %v2346
    %v2371 = vsel %vm2248, %v2370, %v2346
    %v2372 = vsel %vm2247, %v74, %v2369
    %v2373 = vsel %vm2247, 0, %v2371
    %v2374 = vmul.f32 %v2372, %v2372
    %v2375 = vmul.f32 %v2374, -0.001358992
    %v2376 = vadd.f32 %v2375, 0.041655596
    %v2377 = vmul.f32 %v2374, %v2376
    %v2378 = vadd.f32 %v2377, -0.4999988
    %v2379 = vmul.f32 %v2374, %v2378
    %v2380 = vadd.f32 1.0, %v2379
    %v2381 = vmul.f32 %v2372, %v2372
    %v2382 = vmul.f32 %v2381, -0.00019511016
    %v2383 = vadd.f32 %v2382, 0.008332121
    %v2384 = vmul.f32 %v2381, %v2383
    %v2385 = vadd.f32 %v2384, -0.16666654
    %v2386 = vmul.f32 %v2381, %v2385
    %v2387 = vadd.f32 %v2386, 1.0
    %v2388 = vmul.f32 %v2387, %v2372
    %vm2389 = vweird.f32 %v74
    %v2390 = vadd.s32 %v2373, 3
    %v2391 = vand.u32 %v2390, 3
    %vm2392 = vcmp.lt.s32.totalorder %v2391, 2
    %vm2393 = vcmp.eq.s32.totalorder %v2391, 0
    %v2394 = vxor.u32 %v2388, 2147483648
    %v2395 = vsel %vm2393, %v2380, %v2394
    %vm2396 = vcmp.eq.s32.totalorder %v2391, 2
    %v2397 = vxor.u32 %v2380, 2147483648
    %v2398 = vsel %vm2396, %v2397, %v2388
    %v2399 = vsel %vm2392, %v2395, %v2398
    %v2400 = vsel %vm2389, nan, %v2399
    %v2401 = vand.u32 2147483647, %v75
    %vm2402 = vcmp.le.f32.partialorder %v2401, 0.7853982
    %vm2403 = vcmp.lt.s32.totalorder %v75, 0
    %v2404 = vand.u32 %v75, 2139095040
    %v2405 = vshrl.u32 %v2404, 23
    %v2406 = vsub.s32 %v2405, 127
    %v2407 = vand.u32 2147483647, %v75
    %v2408 = vand.u32 %v2407, 8388607
    %v2409 = vor.u32 %v2408, 8388608
    %v2410 = vsub.s32 0, %v2409
    %v2411 = vadd.s32 %v2406, 1
    %vm2412 = vcmp.gt.s32.totalorder %v2411, 0
    %v2413 = vsel %vm2412, %v2411, 0
    %v2414 = vshrl.u32 %v2413, 5
    %v2415 = vand.u32 %v2413, 31
    %v2416 = vsub.s32 32, %v2415
    %v2417 = vshrl.u32 683565275, %v2416
    %v2418 = vshll.u32 683565275, %v2415
    %v2419 = vshrl.u32 2475754826, %v2416
    %v2420 = vor.u32 %v2418, %v2419
    %v2421 = vshll.u32 2475754826, %v2415
    %v2422 = vshrl.u32 2131351028, %v2416
    %v2423 = vor.u32 %v2421, %v2422
    %v2424 = vshll.u32 2131351028, %v2415
    %v2425 = vshrl.u32 2102212464, %v2416
    %v2426 = vor.u32 %v2424, %v2425
    %v2427 = vshll.u32 2102212464, %v2415
    %v2428 = vshrl.u32 920167782, %v2416
    %v2429 = vor.u32 %v2427, %v2428
    %v2430 = vshll.u32 920167782, %v2415
    %v2431 = vshrl.u32 1326507024, %v2416
    %v2432 = vor.u32 %v2430, %v2431
    %vm2433 = vcmp.lt.s32.totalorder %v2414, 1
    %vm2434 = vcmp.lt.s32.totalorder %v2414, 2
    %vm2435 = vcmp.lt.s32.totalorder %v2414, 3
    %vm2436 = vcmp.lt.s32.totalorder %v2414, 4
    %v2437 = vsel %vm2433, %v2417, %v2420
    %v2438 = vsel %vm2436, %v2426, 2102212464
    %v2439 = vsel %vm2435, %v2423, %v2438
    %v2440 = vsel %vm2434, %v2437, %v2439
    %v2441 = vsel %vm2433, %v2420, %v2423
    %v2442 = vsel %vm2436, %v2429, 920167782
    %v2443 = vsel %vm2435, %v2426, %v2442
    %v2444 = vsel %vm2434, %v2441, %v2443
    %v2445 = vsel %vm2433, %v2423, %v2426
    %v2446 = vsel %vm2436, %v2432, 1326507024
    %v2447 = vsel %vm2435, %v2429, %v2446
    %v2448 = vsel %vm2434, %v2445, %v2447
    %v2449 = vshll.u32 %v2409, 8
    %v2450 = vand.u32 %v2449, 65535
    %v2451 = vshrl.u32 %v2449, 16
    %v2452 = vand.u32 %v2448, 65535
    %v2453 = vshrl.u32 %v2448, 16
    %v2454 = vmul.u32 %v2450, %v2452
    %v2455 = vmul.u32 %v2450, %v2453
    %v2456 = vmul.u32 %v2451, %v2452
    %v2457 = vmul.u32 %v2451, %v2453
    %v2458 = vshll.u32 %v2455, 16
    %v2459 = vshrl.u32 %v2455, 16
    %v2460 = vshll.u32 %v2456, 16
    %v2461 = vshrl.u32 %v2456, 16
    %vm2462 = vc.u32 %v2454, %v2458
    %v2463 = vsel %vm2462, 1, 0
    %v2464 = vadd.s32 %v2454, %v2458
    %v2465 = vadd.s32 %v2457, %v2463
    %vm2466 = vc.u32 %v2464, %v2460
    %v2467 = vsel %vm2466, 1, 0
    %v2468 = vadd.s32 %v2464, %v2460
    %v2469 = vadd.s32 %v2465, %v2467
    %v2470 = vadd.s32 %v2469, %v2459
    %v2471 = vadd.s32 %v2470, %v2461
    %v2472 = vand.u32 %v2449, 65535
    %v2473 = vshrl.u32 %v2449, 16
    %v2474 = vand.u32 %v2444, 65535
    %v2475 = vshrl.u32 %v2444, 16
    %v2476 = vmul.u32 %v2472, %v2474
    %v2477 = vmul.u32 %v2472, %v2475
    %v2478 = vmul.u32 %v2473, %v2474
    %v2479 = vmul.u32 %v2473, %v2475
    %v2480 = vshll.u32 %v2477, 16
    %v2481 = vshrl.u32 %v2477, 16
    %v2482 = vshll.u32 %v2478, 16
    %v2483 = vshrl.u32 %v2478, 16
    %vm2484 = vc.u32 %v2476, %v2480
    %v2485 = vsel %vm2484, 1, 0
    %v2486 = vadd.s32 %v2476, %v2480
    %v2487 = vadd.s32 %v2479, %v2485
    %vm2488 = vc.u32 %v2486, %v2482
    %v2489 = vsel %vm2488, 1, 0
    %v2490 = vadd.s32 %v2486, %v2482
    %v2491 = vadd.s32 %v2487, %v2489
    %v2492 = vadd.s32 %v2491, %v2481
    %v2493 = vadd.s32 %v2492, %v2483
    %v2494 = vmul.u32 %v2449, %v2440
    %v2495 = vadd.s32 %v2471, %v2490
    %vm2496 = vc.u32 %v2471, %v2490
    %v2497 = vadd.s32 %v2493, 1
    %v2498 = vsel %vm2496, %v2497, %v2493
    %v2499 = vadd.s32 %v2494, %v2498
    %v2500 = vadd.s32 %v2499, 536870912
    %v2501 = vshrl.u32 %v2500, 30
    %v2502 = vshll.u32 %v2501, 30
    %v2503 = vsub.s32 %v2499, %v2502
    %vm2504 = vcmp.lt.s32.totalorder %v2503, 0
    %v2505 = vsub.s32 0, %v2503
    %v2506 = vsel %vm2504, %v2505, %v2503
    %v2507 = vclz %v2506
    %v2508 = vsub.s32 %v2507, 2
    %vm2509 = vcmp.gt.s32.totalorder 0, %v2508
    %v2510 = vsel %vm2509, 0, %v2508
    %v2511 = vsub.s32 32, %v2510
    %v2512 = vshll.u32 %v2503, %v2510
    %v2513 = vshrl.u32 %v2495, %v2511
    %v2514 = vor.u32 %v2512, %v2513
    %v2515 = vsub.s32 4294967266, %v2510
    %v2516 = vadd.s32 %v2515, 127
    %v2517 = vshll.u32 %v2516, 23
    %v2518 = vor.u32 4788187, %v2517
    %v2519 = vand.u32 2147483647, %v2518
    %v2521 = vcvt.s32.f32 %v2514
    %v2522 = vmul.f32 %v2521, %v2519
    %v2523 = vxor.u32 %v2522, 2147483648
    %v2524 = vsel %vm2403, %v2523, %v2522
    %v2525 = vsub.s32 4, %v2501
    %v2526 = vsel %vm2403, %v2525, %v2501
    %v2527 = vsel %vm2402, %v75, %v2524
    %v2528 = vsel %vm2402, 0, %v2526
    %v2529 = vmul.f32 %v2527, %v2527
    %v2530 = vmul.f32 %v2529, -0.001358992
    %v2531 = vadd.f32 %v2530, 0.041655596
    %v2532 = vmul.f32 %v2529, %v2531
    %v2533 = vadd.f32 %v2532, -0.4999988
    %v2534 = vmul.f32 %v2529, %v2533
    %v2535 = vadd.f32 1.0, %v2534
    %v2536 = vmul.f32 %v2527, %v2527
    %v2537 = vmul.f32 %v2536, -0.00019511016
    %v2538 = vadd.f32 %v2537, 0.008332121
    %v2539 = vmul.f32 %v2536, %v2538
    %v2540 = vadd.f32 %v2539, -0.16666654
    %v2541 = vmul.f32 %v2536, %v2540
    %v2542 = vadd.f32 %v2541, 1.0
    %v2543 = vmul.f32 %v2542, %v2527
    %vm2544 = vweird.f32 %v75
    %v2545 = vadd.s32 %v2528, 3
    %v2546 = vand.u32 %v2545, 3
    %vm2547 = vcmp.lt.s32.totalorder %v2546, 2
    %vm2548 = vcmp.eq.s32.totalorder %v2546, 0
    %v2549 = vxor.u32 %v2543, 2147483648
    %v2550 = vsel %vm2548, %v2535, %v2549
    %vm2551 = vcmp.eq.s32.totalorder %v2546, 2
    %v2552 = vxor.u32 %v2535, 2147483648
    %v2553 = vsel %vm2551, %v2552, %v2543
    %v2554 = vsel %vm2547, %v2550, %v2553
    %v2555 = vsel %vm2544, nan, %v2554
    %v2556 = vstv %s41
    %v2557 = vmul.f32 %v2556, %v230
    %v2558 = vmul.f32 %v2556, %v385
    %v2559 = vmul.f32 %v2556, %v540
    %v2560 = vmul.f32 %v2556, %v695
    %v2561 = vmul.f32 %v2556, %v850
    %v2562 = vmul.f32 %v2556, %v1005
    %v2563 = vmul.f32 %v2556, %v1160
    %v2564 = vmul.f32 %v2556, %v1315
    %v2565 = vmul.f32 %v2556, %v1470
    %v2566 = vmul.f32 %v2556, %v1625
    %v2567 = vmul.f32 %v2556, %v1780
    %v2568 = vmul.f32 %v2556, %v1935
    %v2569 = vmul.f32 %v2556, %v2090
    %v2570 = vmul.f32 %v2556, %v2245
    %v2571 = vmul.f32 %v2556, %v2400
    %v2572 = vmul.f32 %v2556, %v2555
    %2573 = vst [vmem:[#allocation7] sm:$0xff] %v2557
    %2574 = vst [vmem:[#allocation7 + $0x8] sm:$0xff] %v2558
    %2575 = vst [vmem:[#allocation7 + $0x10] sm:$0xff] %v2559
    %2576 = vst [vmem:[#allocation7 + $0x18] sm:$0xff] %v2560
    %2577 = vst [vmem:[#allocation7 + $0x20] sm:$0xff] %v2561
    %2578 = vst [vmem:[#allocation7 + $0x28] sm:$0xff] %v2562
    %2579 = vst [vmem:[#allocation7 + $0x30] sm:$0xff] %v2563
    %2580 = vst [vmem:[#allocation7 + $0x38] sm:$0xff] %v2564
    %2581 = vst [vmem:[#allocation7 + $0x40] sm:$0xff] %v2565
    %2582 = vst [vmem:[#allocation7 + $0x48] sm:$0xff] %v2566
    %2583 = vst [vmem:[#allocation7 + $0x50] sm:$0xff] %v2567
    %2584 = vst [vmem:[#allocation7 + $0x58] sm:$0xff] %v2568
    %2585 = vst [vmem:[#allocation7 + $0x60] sm:$0xff] %v2569
    %2586 = vst [vmem:[#allocation7 + $0x68] sm:$0xff] %v2570
    %2587 = vst [vmem:[#allocation7 + $0x70] sm:$0xff] %v2571
    %2588 = vst [vmem:[#allocation7 + $0x78] sm:$0xff] %v2572
    // Predicated region
    $region18: #{tpu_custom_call.1} parent=1 // pred_check
      _
    $region19: #{tpu_custom_call.1} parent=1 // pred_check_branch
      %2590 = sbr.rel (0) target = $region21
    $region20: #{tpu_custom_call.1} parent=1 // pred_region
      %2592 = vsyncadd [#allocation4], 0
      %s2593 = sshll.u32 [#allocation7], 4
      %s2594 = int_to_ptr.vmem [resolvable:$true] %s2593
      %s2595 = sshll.u32 %s2, 4
      %s2596 = int_to_ptr.hbm [resolvable:$true] %s2595
      %2601 = dma.vmem_to_hbm [thread:$0]  %s2594, 2048, %s2596, [#allocation4], 1024, 1024, 64
    $region21: #{tpu_custom_call.1} parent=1 // pred_fallthru
      _
    // Predicated region
    $region22: #{tpu_custom_call.1} parent=1 // pred_check
      _
    $region23: #{tpu_custom_call.1} parent=1 // pred_check_branch
      %2603 = sbr.rel (0) target = $region25
    $region24: #{tpu_custom_call.1} parent=1 // pred_region
      %2605 = dma.done [#allocation4], 2048
    $region25: #{tpu_custom_call.1} parent=1 // pred_fallthru
      _
    %2606 = vsyncpa [#allocation3], 1
    %2607 = vsyncpa [#allocation4], 1
    %2608 = vsyncpa [#allocation5], 1

</llo_original>
